<compile_context>
chip_gen: v5e
topology: v5e:2x2
jax: 0.10.0
libtpu: 0.0.40
codegen_flags: <defaults>
</compile_context>

<pallas_src>
import jax
import jax.numpy as jnp
from jax import lax
from jax.experimental import pallas as pl
from jax.experimental.pallas import tpu as pltpu


def lstm_bidir_kernel(pgf_ref, pgb_ref, whh_ref, coef_ref, off_ref,
                      wfc_ref, bfc_ref, out_ref, h_scr, c_scr):
    # pgf_ref: (tt, tb, 4H) f32 forward pre-gates [i,f,g,o] for tokens t0..t0+tt-1
    # pgb_ref: (tt, tb, 4H) f32 backward pre-gates, fetched from the time-mirrored
    #          block (index_map t -> nt-1-t); local row (tt-1-s) is token T-1-(t0+s)
    # whh_ref: (2H, 8H) f32 block-diagonal fused recurrent weight,
    #          columns per-gate interleaved [i_f,i_b,f_f,f_b,g_f,g_b,o_f,o_b]
    # coef/off:(tb, 2H) int32 affine freeze-mask params (update iff coef*t + off < 0)
    # wfc_ref: (2H, O) fused fc weight, bfc_ref: (1, O) f32 bias
    # h_scr/c_scr: (tb, 2H) f32 persistent fused state [h_f | h_b]
    tt = pgf_ref.shape[0]
    H = pgf_ref.shape[2] // 4
    H2 = 2 * H
    t_blk = pl.program_id(1)
    nt = pl.num_programs(1)

    @pl.when(t_blk == 0)
    def _():
        h_scr[...] = jnp.zeros_like(h_scr)
        c_scr[...] = jnp.zeros_like(c_scr)

    whh = whh_ref[...]            # loaded once per grid step, hoisted out of the loop
    coef = coef_ref[...]
    off = off_ref[...]
    t0 = t_blk * tt

    def step(s, carry):
        h, c = carry                                   # (tb, 2H) f32, live in vregs
        pf = pgf_ref[s]                                # (tb, 4H) token t0+s
        pb = pgb_ref[tt - 1 - s]                       # (tb, 4H) token T-1-(t0+s)
        # interleave per gate -> (tb, 8H) = [i_f,i_b,f_f,f_b,g_f,g_b,o_f,o_b]
        pg = jnp.concatenate(
            [pf[:, 0 * H:1 * H], pb[:, 0 * H:1 * H],
             pf[:, 1 * H:2 * H], pb[:, 1 * H:2 * H],
             pf[:, 2 * H:3 * H], pb[:, 2 * H:3 * H],
             pf[:, 3 * H:4 * H], pb[:, 3 * H:4 * H]], axis=-1)
        # one fused recurrent matmul covers both directions (block-diagonal weight)
        gates = pg + jnp.dot(h, whh, preferred_element_type=jnp.float32)  # (tb, 8H)
        i_g = jax.nn.sigmoid(gates[:, 0 * H2:1 * H2])
        f_g = jax.nn.sigmoid(gates[:, 1 * H2:2 * H2])
        g_g = jnp.tanh(gates[:, 2 * H2:3 * H2])
        o_g = jax.nn.sigmoid(gates[:, 3 * H2:4 * H2])
        c_new = f_g * c + i_g * g_g
        h_new = o_g * jnp.tanh(c_new)
        # pack_padded_sequence semantics: padded steps freeze the state.
        # fwd half: update iff t < len[b];  bwd half: update iff (T-1-t) < len[b].
        m = (coef * (t0 + s) + off) < 0                # (tb, 2H) bool
        return jnp.where(m, h_new, h), jnp.where(m, c_new, c)

    h, c = lax.fori_loop(0, tt, step, (h_scr[...], c_scr[...]),
                         unroll=min(8, tt))
    h_scr[...] = h
    c_scr[...] = c

    @pl.when(t_blk == nt - 1)
    def _():
        # fc on concat([h_fwd, h_bwd]) == fused h @ [wfc_f; wfc_b] + bias
        out_ref[...] = (jnp.dot(h, wfc_ref[...], preferred_element_type=jnp.float32)
                        + bfc_ref[...])


def lstm_classifier_forward(text, text_lengths, params):
    emb_tab = params["embedding"]
    wih_f, wih_b = params["wih_f"], params["wih_b"]
    whh_f, whh_b = params["whh_f"], params["whh_b"]
    b_f, b_b = params["b_f"], params["b_b"]
    wfc_f, wfc_b = params["wfc_f"], params["wfc_b"]
    bfc = params["bfc"]

    B, T = text.shape
    H = whh_f.shape[0]
    O = bfc.shape[1]

    # embedding gather (nn.Dropout in eval mode is the identity)
    embedded = emb_tab[text]                                            # (B, T, E) f32

    # Hoisted input projections for both directions, produced time-major as two
    # separate (T, B, 4H) tensors in NATURAL time order: no reverse copy and no
    # interleave relayout of the big tensor in HBM.  The backward time reversal is
    # a BlockSpec index_map; the fwd/bwd per-gate interleave is done on the small
    # per-step tile in-kernel.  All matmuls stay f32 (portable; MXU handles f32).
    xg_f = jnp.einsum("bte,eg->tbg", embedded, wih_f,
                      preferred_element_type=jnp.float32) + b_f         # (T, B, 4H)
    xg_b = jnp.einsum("bte,eg->tbg", embedded, wih_b,
                      preferred_element_type=jnp.float32) + b_b         # (T, B, 4H)
    # TODO(synk): on real TPU hardware, store/stream xg_f/xg_b as bf16 to halve the
    # dominant pre-gate HBM<->VMEM traffic.

    # Block-diagonal fused recurrent weight (2H, 8H): rows [h_f | h_b], columns
    # per-gate interleaved [i_f,i_b,f_f,f_b,g_f,g_b,o_f,o_b].
    zeros = jnp.zeros((H, 4, H), jnp.float32)
    whh_top = jnp.concatenate([whh_f.reshape(H, 4, H), zeros], axis=-1)
    whh_bot = jnp.concatenate([zeros, whh_b.reshape(H, 4, H)], axis=-1)
    whh_fused = jnp.concatenate([whh_top, whh_bot], axis=0).reshape(2 * H, 8 * H)

    # fused fc weight for concat([h_f, h_b])
    wfc = jnp.concatenate([wfc_f, wfc_b], axis=0)                       # (2H, O)

    # lane-dense affine freeze-mask params: update iff coef*t + off < 0
    lens = text_lengths.astype(jnp.int32)[:, None]                      # (B, 1)
    coef = jnp.concatenate([jnp.ones((B, H), jnp.int32),
                            -jnp.ones((B, H), jnp.int32)], axis=1)      # (B, 2H)
    off = jnp.concatenate([-jnp.broadcast_to(lens, (B, H)),
                           (T - 1) - jnp.broadcast_to(lens, (B, H))], axis=1)

    # Batch tile: multiple of 8 (32-64 at large B) so the ("parallel",) batch axis
    # shards across TensorCores; keep >= 2 batch tiles where possible (v7x megacore).
    if B % 8 == 0:
        tb = min(64, B)
        if B // tb < 2 and B % 16 == 0:
            tb = B // 2
    else:
        tb = B
    # Time tile: stream T through a trailing "arbitrary" grid axis (P3 accumulator).
    tt = next(c for c in (32, 16, 8, 4, 2, 1) if T % c == 0)
    nt = T // tt
    grid = (B // tb, nt)

    out = pl.pallas_call(
        lstm_bidir_kernel,
        out_shape=jax.ShapeDtypeStruct((B, O), jnp.float32),
        grid_spec=pltpu.PrefetchScalarGridSpec(
            num_scalar_prefetch=0,
            grid=grid,
            in_specs=[
                pl.BlockSpec((tt, tb, 4 * H), lambda i, t: (t, i, 0)),           # fwd pre-gates
                pl.BlockSpec((tt, tb, 4 * H), lambda i, t: (nt - 1 - t, i, 0)),  # bwd (time-mirrored)
                pl.BlockSpec((2 * H, 8 * H), lambda i, t: (0, 0)),               # whh_fused
                pl.BlockSpec((tb, 2 * H), lambda i, t: (i, 0)),                  # coef
                pl.BlockSpec((tb, 2 * H), lambda i, t: (i, 0)),                  # off
                pl.BlockSpec((2 * H, O), lambda i, t: (0, 0)),                   # wfc
                pl.BlockSpec((1, O), lambda i, t: (0, 0)),                       # bfc
            ],
            out_specs=pl.BlockSpec((tb, O), lambda i, t: (i, 0)),
            scratch_shapes=[pltpu.VMEM((tb, 2 * H), jnp.float32),   # h state
                            pltpu.VMEM((tb, 2 * H), jnp.float32)],  # c state
        ),
        compiler_params=pltpu.CompilerParams(
            dimension_semantics=("parallel", "arbitrary"),
            vmem_limit_bytes=32 * 1024 * 1024,   # streamed pre-gates: 32 MiB is ample, fits v7x
        ),
    )(xg_f, xg_b, whh_fused, coef, off, wfc, bfc)
    return out


def reference_forward(text, text_lengths, params):
    """Pure-JAX f32 reference of the same math (correctness check)."""
    emb = params["embedding"][text]                                     # (B, T, E)
    B, T, _ = emb.shape
    H = params["whh_f"].shape[0]
    mask = jnp.arange(T)[None, :] < text_lengths[:, None]               # (B, T) bool

    def run_dir(wih, whh, b, times):
        h = jnp.zeros((B, H), jnp.float32)
        c = jnp.zeros((B, H), jnp.float32)
        for t in times:
            x = emb[:, t, :]
            gates = jnp.dot(x, wih) + jnp.dot(h, whh) + b
            i = jax.nn.sigmoid(gates[:, 0 * H:1 * H])
            f = jax.nn.sigmoid(gates[:, 1 * H:2 * H])
            g = jnp.tanh(gates[:, 2 * H:3 * H])
            o = jax.nn.sigmoid(gates[:, 3 * H:4 * H])
            c_new = f * c + i * g
            h_new = o * jnp.tanh(c_new)
            m = mask[:, t][:, None]
            c = jnp.where(m, c_new, c)
            h = jnp.where(m, h_new, h)
        return h

    h_f = run_dir(params["wih_f"], params["whh_f"], params["b_f"], range(T))
    h_b = run_dir(params["wih_b"], params["whh_b"], params["b_b"], range(T - 1, -1, -1))
    hcat = jnp.concatenate([h_f, h_b], axis=1)
    wfc = jnp.concatenate([params["wfc_f"], params["wfc_b"]], axis=0)
    return jnp.dot(hcat, wfc) + params["bfc"]


def init_params(key, vocab_size, embedding_dim, hidden_dim, output_dim):
    ks = jax.random.split(key, 12)
    s = 0.1
    emb = s * jax.random.normal(ks[0], (vocab_size, embedding_dim), jnp.float32)
    emb = emb.at[0].set(0.0)  # padding_idx=0
    params = {
        "embedding": emb,
        # forward direction (E,4H)/(H,4H), combined bias (b_ih + b_hh) as (1,4H)
        "wih_f": s * jax.random.normal(ks[1], (embedding_dim, 4 * hidden_dim), jnp.float32),
        "whh_f": s * jax.random.normal(ks[2], (hidden_dim, 4 * hidden_dim), jnp.float32),
        "b_f":   s * jax.random.normal(ks[3], (1, 4 * hidden_dim), jnp.float32),
        # backward direction
        "wih_b": s * jax.random.normal(ks[4], (embedding_dim, 4 * hidden_dim), jnp.float32),
        "whh_b": s * jax.random.normal(ks[5], (hidden_dim, 4 * hidden_dim), jnp.float32),
        "b_b":   s * jax.random.normal(ks[6], (1, 4 * hidden_dim), jnp.float32),
        # fc: (2H, O) split into fwd/bwd halves, bias (1, O)
        "wfc_f": s * jax.random.normal(ks[7], (hidden_dim, output_dim), jnp.float32),
        "wfc_b": s * jax.random.normal(ks[8], (hidden_dim, output_dim), jnp.float32),
        "bfc":   s * jax.random.normal(ks[9], (1, output_dim), jnp.float32),
    }
    return params


if __name__ == "__main__":
    vocab_size, embedding_dim, hidden_dim, output_dim = 50, 16, 32, 2
    B, T = 2, 8

    key = jax.random.PRNGKey(0)
    k_param, k_text = jax.random.split(key)
    params = init_params(k_param, vocab_size, embedding_dim, hidden_dim, output_dim)

    text_lengths = jnp.array([8, 5], dtype=jnp.int32)
    text = jax.random.randint(k_text, (B, T), 1, vocab_size, dtype=jnp.int32)
    # zero-pad beyond each sequence's length (padding_idx = 0)
    text = jnp.where(jnp.arange(T)[None, :] < text_lengths[:, None], text, 0)

    fwd = jax.jit(lstm_classifier_forward)
    out = jax.block_until_ready(fwd(text, text_lengths, params))

    ref = reference_forward(text, text_lengths, params)
    assert out.shape == (B, output_dim)
    assert jnp.allclose(out, ref, atol=2e-3, rtol=2e-3), (out, ref)

    print("KERNEL_OK")
</pallas_src>

<mosaic_0001>
module attributes {stable_mosaic.version = 11 : i64} {
  func.func @lstm_bidir_kernel(%arg0: i32, %arg1: i32, %arg2: memref<8x2x128xf32, #tpu.memory_space<vmem>>, %arg3: memref<8x2x128xf32, #tpu.memory_space<vmem>>, %arg4: memref<64x256xf32, #tpu.memory_space<vmem>>, %arg5: memref<2x64xi32, #tpu.memory_space<vmem>>, %arg6: memref<2x64xi32, #tpu.memory_space<vmem>>, %arg7: memref<64x2xf32, #tpu.memory_space<vmem>>, %arg8: memref<1x2xf32, #tpu.memory_space<vmem>>, %arg9: memref<2x2xf32, #tpu.memory_space<vmem>>, %arg10: memref<2x64xf32, #tpu.memory_space<vmem>>, %arg11: memref<2x64xf32, #tpu.memory_space<vmem>>) attributes {dimension_semantics = [#tpu.dimension_semantics<parallel>, #tpu.dimension_semantics<arbitrary>], iteration_bounds = array<i64: 1, 1>, scalar_prefetch = 0 : i64, scratch_operands = 2 : i64, tpu.core_type = #tpu.core_type<tc>, window_params = [{transform_indices = @transform_0, window_bounds = array<i64: 8, 2, 128>}, {transform_indices = @transform_1, window_bounds = array<i64: 8, 2, 128>}, {pipeline_mode = #tpu.pipeline_mode<synchronous>, transform_indices = @transform_2, window_bounds = array<i64: 64, 256>}, {transform_indices = @transform_3, window_bounds = array<i64: 2, 64>}, {transform_indices = @transform_4, window_bounds = array<i64: 2, 64>}, {pipeline_mode = #tpu.pipeline_mode<synchronous>, transform_indices = @transform_5, window_bounds = array<i64: 64, 2>}, {pipeline_mode = #tpu.pipeline_mode<synchronous>, transform_indices = @transform_6, window_bounds = array<i64: 1, 2>}, {transform_indices = @transform_7, window_bounds = array<i64: 2, 2>}]} {
    %c0_i32 = arith.constant 0 : i32
    %0 = arith.cmpi eq, %arg1, %c0_i32 : i32
    %1 = arith.extui %0 : i1 to i32
    %c0_i32_0 = arith.constant 0 : i32
    %2 = arith.cmpi ne, %1, %c0_i32_0 : i32
    scf.if %2 {
      %cst_97 = arith.constant 0.000000e+00 : f32
      %422 = vector.broadcast %cst_97 : f32 to vector<2x64xf32>
      %c0_98 = arith.constant 0 : index
      %c0_99 = arith.constant 0 : index
      %423 = vector.load %arg10[%c0_98, %c0_99] : memref<2x64xf32, #tpu.memory_space<vmem>>, vector<2x64xf32>
      tpu.vector_store %arg10[%c0_98, %c0_99], %422 {strides = array<i32>} : memref<2x64xf32, #tpu.memory_space<vmem>>, vector<2x64xf32>,
      %cst_100 = arith.constant 0.000000e+00 : f32
      %424 = vector.broadcast %cst_100 : f32 to vector<2x64xf32>
      %c0_101 = arith.constant 0 : index
      %c0_102 = arith.constant 0 : index
      %425 = vector.load %arg11[%c0_101, %c0_102] : memref<2x64xf32, #tpu.memory_space<vmem>>, vector<2x64xf32>
      tpu.vector_store %arg11[%c0_101, %c0_102], %424 {strides = array<i32>} : memref<2x64xf32, #tpu.memory_space<vmem>>, vector<2x64xf32>,
    } else {
    }
    %c0 = arith.constant 0 : index
    %c0_1 = arith.constant 0 : index
    %3 = vector.load %arg4[%c0, %c0_1] : memref<64x256xf32, #tpu.memory_space<vmem>>, vector<64x256xf32>
    %c0_2 = arith.constant 0 : index
    %c0_3 = arith.constant 0 : index
    %4 = vector.load %arg5[%c0_2, %c0_3] : memref<2x64xi32, #tpu.memory_space<vmem>>, vector<2x64xi32>
    %c0_4 = arith.constant 0 : index
    %c0_5 = arith.constant 0 : index
    %5 = vector.load %arg6[%c0_4, %c0_5] : memref<2x64xi32, #tpu.memory_space<vmem>>, vector<2x64xi32>
    %c8_i32 = arith.constant 8 : i32
    %6 = arith.muli %arg1, %c8_i32 : i32
    %c0_6 = arith.constant 0 : index
    %c0_7 = arith.constant 0 : index
    %7 = vector.load %arg10[%c0_6, %c0_7] : memref<2x64xf32, #tpu.memory_space<vmem>>, vector<2x64xf32>
    %c0_8 = arith.constant 0 : index
    %c0_9 = arith.constant 0 : index
    %8 = vector.load %arg11[%c0_8, %c0_9] : memref<2x64xf32, #tpu.memory_space<vmem>>, vector<2x64xf32>
    %c0_i32_10 = arith.constant 0 : i32
    %9 = arith.index_cast %c0_i32_10 : i32 to index
    %c0_11 = arith.constant 0 : index
    %c0_12 = arith.constant 0 : index
    %10 = vector.load %arg2[%9, %c0_11, %c0_12] : memref<8x2x128xf32, #tpu.memory_space<vmem>>, vector<1x2x128xf32>
    %11 = vector.shape_cast %10 : vector<1x2x128xf32> to vector<2x128xf32>
    %c7_i32 = arith.constant 7 : i32
    %12 = arith.subi %c7_i32, %c0_i32_10 : i32
    %13 = arith.index_cast %12 : i32 to index
    %c0_13 = arith.constant 0 : index
    %c0_14 = arith.constant 0 : index
    %14 = vector.load %arg3[%13, %c0_13, %c0_14] : memref<8x2x128xf32, #tpu.memory_space<vmem>>, vector<1x2x128xf32>
    %15 = vector.shape_cast %14 : vector<1x2x128xf32> to vector<2x128xf32>
    %16 = vector.extract_strided_slice %11 {offsets = [0, 0], sizes = [2, 32], strides = [1, 1]} : vector<2x128xf32> to vector<2x32xf32>
    %17 = vector.extract_strided_slice %15 {offsets = [0, 0], sizes = [2, 32], strides = [1, 1]} : vector<2x128xf32> to vector<2x32xf32>
    %18 = vector.extract_strided_slice %11 {offsets = [0, 32], sizes = [2, 32], strides = [1, 1]} : vector<2x128xf32> to vector<2x32xf32>
    %19 = vector.extract_strided_slice %15 {offsets = [0, 32], sizes = [2, 32], strides = [1, 1]} : vector<2x128xf32> to vector<2x32xf32>
    %20 = vector.extract_strided_slice %11 {offsets = [0, 64], sizes = [2, 32], strides = [1, 1]} : vector<2x128xf32> to vector<2x32xf32>
    %21 = vector.extract_strided_slice %15 {offsets = [0, 64], sizes = [2, 32], strides = [1, 1]} : vector<2x128xf32> to vector<2x32xf32>
    %22 = vector.extract_strided_slice %11 {offsets = [0, 96], sizes = [2, 32], strides = [1, 1]} : vector<2x128xf32> to vector<2x32xf32>
    %23 = vector.extract_strided_slice %15 {offsets = [0, 96], sizes = [2, 32], strides = [1, 1]} : vector<2x128xf32> to vector<2x32xf32>
    %24 = tpu.concatenate %16, %17, %18, %19, %20, %21, %22, %23 in 1 : vector<2x32xf32>, vector<2x32xf32>, vector<2x32xf32>, vector<2x32xf32>, vector<2x32xf32>, vector<2x32xf32>, vector<2x32xf32>, vector<2x32xf32> -> vector<2x256xf32>
    %cst = arith.constant dense<0.000000e+00> : vector<2x256xf32>
    %25 = tpu.matmul %7, %3, %cst {dimension_numbers = #tpu.dot_dimension_numbers<[1], [0], [0], [1], [0, 0, 1, 1], [], []>} : vector<2x64xf32>, vector<64x256xf32>, vector<2x256xf32> -> vector<2x256xf32>
    %26 = arith.addf %24, %25 : vector<2x256xf32>
    %27 = vector.extract_strided_slice %26 {offsets = [0, 0], sizes = [2, 64], strides = [1, 1]} : vector<2x256xf32> to vector<2x64xf32>
    %28 = arith.negf %27 : vector<2x64xf32>
    %29 = math.exp %28 : vector<2x64xf32>
    %cst_15 = arith.constant 1.000000e+00 : f32
    %30 = vector.broadcast %cst_15 : f32 to vector<2x64xf32>
    %31 = arith.addf %30, %29 : vector<2x64xf32>
    %32 = arith.divf %30, %31 : vector<2x64xf32>
    %33 = vector.extract_strided_slice %26 {offsets = [0, 64], sizes = [2, 64], strides = [1, 1]} : vector<2x256xf32> to vector<2x64xf32>
    %34 = arith.negf %33 : vector<2x64xf32>
    %35 = math.exp %34 : vector<2x64xf32>
    %cst_16 = arith.constant 1.000000e+00 : f32
    %36 = vector.broadcast %cst_16 : f32 to vector<2x64xf32>
    %37 = arith.addf %36, %35 : vector<2x64xf32>
    %38 = arith.divf %36, %37 : vector<2x64xf32>
    %39 = vector.extract_strided_slice %26 {offsets = [0, 128], sizes = [2, 64], strides = [1, 1]} : vector<2x256xf32> to vector<2x64xf32>
    %40 = math.tanh %39 : vector<2x64xf32>
    %41 = vector.extract_strided_slice %26 {offsets = [0, 192], sizes = [2, 64], strides = [1, 1]} : vector<2x256xf32> to vector<2x64xf32>
    %42 = arith.negf %41 : vector<2x64xf32>
    %43 = math.exp %42 : vector<2x64xf32>
    %cst_17 = arith.constant 1.000000e+00 : f32
    %44 = vector.broadcast %cst_17 : f32 to vector<2x64xf32>
    %45 = arith.addf %44, %43 : vector<2x64xf32>
    %46 = arith.divf %44, %45 : vector<2x64xf32>
    %47 = arith.mulf %38, %8 : vector<2x64xf32>
    %48 = arith.mulf %32, %40 : vector<2x64xf32>
    %49 = arith.addf %47, %48 : vector<2x64xf32>
    %50 = math.tanh %49 : vector<2x64xf32>
    %51 = arith.mulf %46, %50 : vector<2x64xf32>
    %52 = arith.addi %6, %c0_i32_10 : i32
    %53 = vector.broadcast %52 : i32 to vector<2x64xi32>
    %54 = arith.muli %4, %53 : vector<2x64xi32>
    %55 = arith.addi %54, %5 : vector<2x64xi32>
    %c0_i32_18 = arith.constant 0 : i32
    %56 = vector.broadcast %c0_i32_18 : i32 to vector<2x64xi32>
    %57 = arith.cmpi slt, %55, %56 : vector<2x64xi32>
    %58 = arith.select %57, %51, %7 : vector<2x64xi1>, vector<2x64xf32>
    %59 = arith.select %57, %49, %8 : vector<2x64xi1>, vector<2x64xf32>
    %c1_i32 = arith.constant 1 : i32
    %60 = arith.index_cast %c1_i32 : i32 to index
    %c0_19 = arith.constant 0 : index
    %c0_20 = arith.constant 0 : index
    %61 = vector.load %arg2[%60, %c0_19, %c0_20] : memref<8x2x128xf32, #tpu.memory_space<vmem>>, vector<1x2x128xf32>
    %62 = vector.shape_cast %61 : vector<1x2x128xf32> to vector<2x128xf32>
    %c7_i32_21 = arith.constant 7 : i32
    %63 = arith.subi %c7_i32_21, %c1_i32 : i32
    %64 = arith.index_cast %63 : i32 to index
    %c0_22 = arith.constant 0 : index
    %c0_23 = arith.constant 0 : index
    %65 = vector.load %arg3[%64, %c0_22, %c0_23] : memref<8x2x128xf32, #tpu.memory_space<vmem>>, vector<1x2x128xf32>
    %66 = vector.shape_cast %65 : vector<1x2x128xf32> to vector<2x128xf32>
    %67 = vector.extract_strided_slice %62 {offsets = [0, 0], sizes = [2, 32], strides = [1, 1]} : vector<2x128xf32> to vector<2x32xf32>
    %68 = vector.extract_strided_slice %66 {offsets = [0, 0], sizes = [2, 32], strides = [1, 1]} : vector<2x128xf32> to vector<2x32xf32>
    %69 = vector.extract_strided_slice %62 {offsets = [0, 32], sizes = [2, 32], strides = [1, 1]} : vector<2x128xf32> to vector<2x32xf32>
    %70 = vector.extract_strided_slice %66 {offsets = [0, 32], sizes = [2, 32], strides = [1, 1]} : vector<2x128xf32> to vector<2x32xf32>
    %71 = vector.extract_strided_slice %62 {offsets = [0, 64], sizes = [2, 32], strides = [1, 1]} : vector<2x128xf32> to vector<2x32xf32>
    %72 = vector.extract_strided_slice %66 {offsets = [0, 64], sizes = [2, 32], strides = [1, 1]} : vector<2x128xf32> to vector<2x32xf32>
    %73 = vector.extract_strided_slice %62 {offsets = [0, 96], sizes = [2, 32], strides = [1, 1]} : vector<2x128xf32> to vector<2x32xf32>
    %74 = vector.extract_strided_slice %66 {offsets = [0, 96], sizes = [2, 32], strides = [1, 1]} : vector<2x128xf32> to vector<2x32xf32>
    %75 = tpu.concatenate %67, %68, %69, %70, %71, %72, %73, %74 in 1 : vector<2x32xf32>, vector<2x32xf32>, vector<2x32xf32>, vector<2x32xf32>, vector<2x32xf32>, vector<2x32xf32>, vector<2x32xf32>, vector<2x32xf32> -> vector<2x256xf32>
    %cst_24 = arith.constant dense<0.000000e+00> : vector<2x256xf32>
    %76 = tpu.matmul %58, %3, %cst_24 {dimension_numbers = #tpu.dot_dimension_numbers<[1], [0], [0], [1], [0, 0, 1, 1], [], []>} : vector<2x64xf32>, vector<64x256xf32>, vector<2x256xf32> -> vector<2x256xf32>
    %77 = arith.addf %75, %76 : vector<2x256xf32>
    %78 = vector.extract_strided_slice %77 {offsets = [0, 0], sizes = [2, 64], strides = [1, 1]} : vector<2x256xf32> to vector<2x64xf32>
    %79 = arith.negf %78 : vector<2x64xf32>
    %80 = math.exp %79 : vector<2x64xf32>
    %cst_25 = arith.constant 1.000000e+00 : f32
    %81 = vector.broadcast %cst_25 : f32 to vector<2x64xf32>
    %82 = arith.addf %81, %80 : vector<2x64xf32>
    %83 = arith.divf %81, %82 : vector<2x64xf32>
    %84 = vector.extract_strided_slice %77 {offsets = [0, 64], sizes = [2, 64], strides = [1, 1]} : vector<2x256xf32> to vector<2x64xf32>
    %85 = arith.negf %84 : vector<2x64xf32>
    %86 = math.exp %85 : vector<2x64xf32>
    %cst_26 = arith.constant 1.000000e+00 : f32
    %87 = vector.broadcast %cst_26 : f32 to vector<2x64xf32>
    %88 = arith.addf %87, %86 : vector<2x64xf32>
    %89 = arith.divf %87, %88 : vector<2x64xf32>
    %90 = vector.extract_strided_slice %77 {offsets = [0, 128], sizes = [2, 64], strides = [1, 1]} : vector<2x256xf32> to vector<2x64xf32>
    %91 = math.tanh %90 : vector<2x64xf32>
    %92 = vector.extract_strided_slice %77 {offsets = [0, 192], sizes = [2, 64], strides = [1, 1]} : vector<2x256xf32> to vector<2x64xf32>
    %93 = arith.negf %92 : vector<2x64xf32>
    %94 = math.exp %93 : vector<2x64xf32>
    %cst_27 = arith.constant 1.000000e+00 : f32
    %95 = vector.broadcast %cst_27 : f32 to vector<2x64xf32>
    %96 = arith.addf %95, %94 : vector<2x64xf32>
    %97 = arith.divf %95, %96 : vector<2x64xf32>
    %98 = arith.mulf %89, %59 : vector<2x64xf32>
    %99 = arith.mulf %83, %91 : vector<2x64xf32>
    %100 = arith.addf %98, %99 : vector<2x64xf32>
    %101 = math.tanh %100 : vector<2x64xf32>
    %102 = arith.mulf %97, %101 : vector<2x64xf32>
    %103 = arith.addi %6, %c1_i32 : i32
    %104 = vector.broadcast %103 : i32 to vector<2x64xi32>
    %105 = arith.muli %4, %104 : vector<2x64xi32>
    %106 = arith.addi %105, %5 : vector<2x64xi32>
    %c0_i32_28 = arith.constant 0 : i32
    %107 = vector.broadcast %c0_i32_28 : i32 to vector<2x64xi32>
    %108 = arith.cmpi slt, %106, %107 : vector<2x64xi32>
    %109 = arith.select %108, %102, %58 : vector<2x64xi1>, vector<2x64xf32>
    %110 = arith.select %108, %100, %59 : vector<2x64xi1>, vector<2x64xf32>
    %c2_i32 = arith.constant 2 : i32
    %111 = arith.index_cast %c2_i32 : i32 to index
    %c0_29 = arith.constant 0 : index
    %c0_30 = arith.constant 0 : index
    %112 = vector.load %arg2[%111, %c0_29, %c0_30] : memref<8x2x128xf32, #tpu.memory_space<vmem>>, vector<1x2x128xf32>
    %113 = vector.shape_cast %112 : vector<1x2x128xf32> to vector<2x128xf32>
    %c7_i32_31 = arith.constant 7 : i32
    %114 = arith.subi %c7_i32_31, %c2_i32 : i32
    %115 = arith.index_cast %114 : i32 to index
    %c0_32 = arith.constant 0 : index
    %c0_33 = arith.constant 0 : index
    %116 = vector.load %arg3[%115, %c0_32, %c0_33] : memref<8x2x128xf32, #tpu.memory_space<vmem>>, vector<1x2x128xf32>
    %117 = vector.shape_cast %116 : vector<1x2x128xf32> to vector<2x128xf32>
    %118 = vector.extract_strided_slice %113 {offsets = [0, 0], sizes = [2, 32], strides = [1, 1]} : vector<2x128xf32> to vector<2x32xf32>
    %119 = vector.extract_strided_slice %117 {offsets = [0, 0], sizes = [2, 32], strides = [1, 1]} : vector<2x128xf32> to vector<2x32xf32>
    %120 = vector.extract_strided_slice %113 {offsets = [0, 32], sizes = [2, 32], strides = [1, 1]} : vector<2x128xf32> to vector<2x32xf32>
    %121 = vector.extract_strided_slice %117 {offsets = [0, 32], sizes = [2, 32], strides = [1, 1]} : vector<2x128xf32> to vector<2x32xf32>
    %122 = vector.extract_strided_slice %113 {offsets = [0, 64], sizes = [2, 32], strides = [1, 1]} : vector<2x128xf32> to vector<2x32xf32>
    %123 = vector.extract_strided_slice %117 {offsets = [0, 64], sizes = [2, 32], strides = [1, 1]} : vector<2x128xf32> to vector<2x32xf32>
    %124 = vector.extract_strided_slice %113 {offsets = [0, 96], sizes = [2, 32], strides = [1, 1]} : vector<2x128xf32> to vector<2x32xf32>
    %125 = vector.extract_strided_slice %117 {offsets = [0, 96], sizes = [2, 32], strides = [1, 1]} : vector<2x128xf32> to vector<2x32xf32>
    %126 = tpu.concatenate %118, %119, %120, %121, %122, %123, %124, %125 in 1 : vector<2x32xf32>, vector<2x32xf32>, vector<2x32xf32>, vector<2x32xf32>, vector<2x32xf32>, vector<2x32xf32>, vector<2x32xf32>, vector<2x32xf32> -> vector<2x256xf32>
    %cst_34 = arith.constant dense<0.000000e+00> : vector<2x256xf32>
    %127 = tpu.matmul %109, %3, %cst_34 {dimension_numbers = #tpu.dot_dimension_numbers<[1], [0], [0], [1], [0, 0, 1, 1], [], []>} : vector<2x64xf32>, vector<64x256xf32>, vector<2x256xf32> -> vector<2x256xf32>
    %128 = arith.addf %126, %127 : vector<2x256xf32>
    %129 = vector.extract_strided_slice %128 {offsets = [0, 0], sizes = [2, 64], strides = [1, 1]} : vector<2x256xf32> to vector<2x64xf32>
    %130 = arith.negf %129 : vector<2x64xf32>
    %131 = math.exp %130 : vector<2x64xf32>
    %cst_35 = arith.constant 1.000000e+00 : f32
    %132 = vector.broadcast %cst_35 : f32 to vector<2x64xf32>
    %133 = arith.addf %132, %131 : vector<2x64xf32>
    %134 = arith.divf %132, %133 : vector<2x64xf32>
    %135 = vector.extract_strided_slice %128 {offsets = [0, 64], sizes = [2, 64], strides = [1, 1]} : vector<2x256xf32> to vector<2x64xf32>
    %136 = arith.negf %135 : vector<2x64xf32>
    %137 = math.exp %136 : vector<2x64xf32>
    %cst_36 = arith.constant 1.000000e+00 : f32
    %138 = vector.broadcast %cst_36 : f32 to vector<2x64xf32>
    %139 = arith.addf %138, %137 : vector<2x64xf32>
    %140 = arith.divf %138, %139 : vector<2x64xf32>
    %141 = vector.extract_strided_slice %128 {offsets = [0, 128], sizes = [2, 64], strides = [1, 1]} : vector<2x256xf32> to vector<2x64xf32>
    %142 = math.tanh %141 : vector<2x64xf32>
    %143 = vector.extract_strided_slice %128 {offsets = [0, 192], sizes = [2, 64], strides = [1, 1]} : vector<2x256xf32> to vector<2x64xf32>
    %144 = arith.negf %143 : vector<2x64xf32>
    %145 = math.exp %144 : vector<2x64xf32>
    %cst_37 = arith.constant 1.000000e+00 : f32
    %146 = vector.broadcast %cst_37 : f32 to vector<2x64xf32>
    %147 = arith.addf %146, %145 : vector<2x64xf32>
    %148 = arith.divf %146, %147 : vector<2x64xf32>
    %149 = arith.mulf %140, %110 : vector<2x64xf32>
    %150 = arith.mulf %134, %142 : vector<2x64xf32>
    %151 = arith.addf %149, %150 : vector<2x64xf32>
    %152 = math.tanh %151 : vector<2x64xf32>
    %153 = arith.mulf %148, %152 : vector<2x64xf32>
    %154 = arith.addi %6, %c2_i32 : i32
    %155 = vector.broadcast %154 : i32 to vector<2x64xi32>
    %156 = arith.muli %4, %155 : vector<2x64xi32>
    %157 = arith.addi %156, %5 : vector<2x64xi32>
    %c0_i32_38 = arith.constant 0 : i32
    %158 = vector.broadcast %c0_i32_38 : i32 to vector<2x64xi32>
    %159 = arith.cmpi slt, %157, %158 : vector<2x64xi32>
    %160 = arith.select %159, %153, %109 : vector<2x64xi1>, vector<2x64xf32>
    %161 = arith.select %159, %151, %110 : vector<2x64xi1>, vector<2x64xf32>
    %c3_i32 = arith.constant 3 : i32
    %162 = arith.index_cast %c3_i32 : i32 to index
    %c0_39 = arith.constant 0 : index
    %c0_40 = arith.constant 0 : index
    %163 = vector.load %arg2[%162, %c0_39, %c0_40] : memref<8x2x128xf32, #tpu.memory_space<vmem>>, vector<1x2x128xf32>
    %164 = vector.shape_cast %163 : vector<1x2x128xf32> to vector<2x128xf32>
    %c7_i32_41 = arith.constant 7 : i32
    %165 = arith.subi %c7_i32_41, %c3_i32 : i32
    %166 = arith.index_cast %165 : i32 to index
    %c0_42 = arith.constant 0 : index
    %c0_43 = arith.constant 0 : index
    %167 = vector.load %arg3[%166, %c0_42, %c0_43] : memref<8x2x128xf32, #tpu.memory_space<vmem>>, vector<1x2x128xf32>
    %168 = vector.shape_cast %167 : vector<1x2x128xf32> to vector<2x128xf32>
    %169 = vector.extract_strided_slice %164 {offsets = [0, 0], sizes = [2, 32], strides = [1, 1]} : vector<2x128xf32> to vector<2x32xf32>
    %170 = vector.extract_strided_slice %168 {offsets = [0, 0], sizes = [2, 32], strides = [1, 1]} : vector<2x128xf32> to vector<2x32xf32>
    %171 = vector.extract_strided_slice %164 {offsets = [0, 32], sizes = [2, 32], strides = [1, 1]} : vector<2x128xf32> to vector<2x32xf32>
    %172 = vector.extract_strided_slice %168 {offsets = [0, 32], sizes = [2, 32], strides = [1, 1]} : vector<2x128xf32> to vector<2x32xf32>
    %173 = vector.extract_strided_slice %164 {offsets = [0, 64], sizes = [2, 32], strides = [1, 1]} : vector<2x128xf32> to vector<2x32xf32>
    %174 = vector.extract_strided_slice %168 {offsets = [0, 64], sizes = [2, 32], strides = [1, 1]} : vector<2x128xf32> to vector<2x32xf32>
    %175 = vector.extract_strided_slice %164 {offsets = [0, 96], sizes = [2, 32], strides = [1, 1]} : vector<2x128xf32> to vector<2x32xf32>
    %176 = vector.extract_strided_slice %168 {offsets = [0, 96], sizes = [2, 32], strides = [1, 1]} : vector<2x128xf32> to vector<2x32xf32>
    %177 = tpu.concatenate %169, %170, %171, %172, %173, %174, %175, %176 in 1 : vector<2x32xf32>, vector<2x32xf32>, vector<2x32xf32>, vector<2x32xf32>, vector<2x32xf32>, vector<2x32xf32>, vector<2x32xf32>, vector<2x32xf32> -> vector<2x256xf32>
    %cst_44 = arith.constant dense<0.000000e+00> : vector<2x256xf32>
    %178 = tpu.matmul %160, %3, %cst_44 {dimension_numbers = #tpu.dot_dimension_numbers<[1], [0], [0], [1], [0, 0, 1, 1], [], []>} : vector<2x64xf32>, vector<64x256xf32>, vector<2x256xf32> -> vector<2x256xf32>
    %179 = arith.addf %177, %178 : vector<2x256xf32>
    %180 = vector.extract_strided_slice %179 {offsets = [0, 0], sizes = [2, 64], strides = [1, 1]} : vector<2x256xf32> to vector<2x64xf32>
    %181 = arith.negf %180 : vector<2x64xf32>
    %182 = math.exp %181 : vector<2x64xf32>
    %cst_45 = arith.constant 1.000000e+00 : f32
    %183 = vector.broadcast %cst_45 : f32 to vector<2x64xf32>
    %184 = arith.addf %183, %182 : vector<2x64xf32>
    %185 = arith.divf %183, %184 : vector<2x64xf32>
    %186 = vector.extract_strided_slice %179 {offsets = [0, 64], sizes = [2, 64], strides = [1, 1]} : vector<2x256xf32> to vector<2x64xf32>
    %187 = arith.negf %186 : vector<2x64xf32>
    %188 = math.exp %187 : vector<2x64xf32>
    %cst_46 = arith.constant 1.000000e+00 : f32
    %189 = vector.broadcast %cst_46 : f32 to vector<2x64xf32>
    %190 = arith.addf %189, %188 : vector<2x64xf32>
    %191 = arith.divf %189, %190 : vector<2x64xf32>
    %192 = vector.extract_strided_slice %179 {offsets = [0, 128], sizes = [2, 64], strides = [1, 1]} : vector<2x256xf32> to vector<2x64xf32>
    %193 = math.tanh %192 : vector<2x64xf32>
    %194 = vector.extract_strided_slice %179 {offsets = [0, 192], sizes = [2, 64], strides = [1, 1]} : vector<2x256xf32> to vector<2x64xf32>
    %195 = arith.negf %194 : vector<2x64xf32>
    %196 = math.exp %195 : vector<2x64xf32>
    %cst_47 = arith.constant 1.000000e+00 : f32
    %197 = vector.broadcast %cst_47 : f32 to vector<2x64xf32>
    %198 = arith.addf %197, %196 : vector<2x64xf32>
    %199 = arith.divf %197, %198 : vector<2x64xf32>
    %200 = arith.mulf %191, %161 : vector<2x64xf32>
    %201 = arith.mulf %185, %193 : vector<2x64xf32>
    %202 = arith.addf %200, %201 : vector<2x64xf32>
    %203 = math.tanh %202 : vector<2x64xf32>
    %204 = arith.mulf %199, %203 : vector<2x64xf32>
    %205 = arith.addi %6, %c3_i32 : i32
    %206 = vector.broadcast %205 : i32 to vector<2x64xi32>
    %207 = arith.muli %4, %206 : vector<2x64xi32>
    %208 = arith.addi %207, %5 : vector<2x64xi32>
    %c0_i32_48 = arith.constant 0 : i32
    %209 = vector.broadcast %c0_i32_48 : i32 to vector<2x64xi32>
    %210 = arith.cmpi slt, %208, %209 : vector<2x64xi32>
    %211 = arith.select %210, %204, %160 : vector<2x64xi1>, vector<2x64xf32>
    %212 = arith.select %210, %202, %161 : vector<2x64xi1>, vector<2x64xf32>
    %c4_i32 = arith.constant 4 : i32
    %213 = arith.index_cast %c4_i32 : i32 to index
    %c0_49 = arith.constant 0 : index
    %c0_50 = arith.constant 0 : index
    %214 = vector.load %arg2[%213, %c0_49, %c0_50] : memref<8x2x128xf32, #tpu.memory_space<vmem>>, vector<1x2x128xf32>
    %215 = vector.shape_cast %214 : vector<1x2x128xf32> to vector<2x128xf32>
    %c7_i32_51 = arith.constant 7 : i32
    %216 = arith.subi %c7_i32_51, %c4_i32 : i32
    %217 = arith.index_cast %216 : i32 to index
    %c0_52 = arith.constant 0 : index
    %c0_53 = arith.constant 0 : index
    %218 = vector.load %arg3[%217, %c0_52, %c0_53] : memref<8x2x128xf32, #tpu.memory_space<vmem>>, vector<1x2x128xf32>
    %219 = vector.shape_cast %218 : vector<1x2x128xf32> to vector<2x128xf32>
    %220 = vector.extract_strided_slice %215 {offsets = [0, 0], sizes = [2, 32], strides = [1, 1]} : vector<2x128xf32> to vector<2x32xf32>
    %221 = vector.extract_strided_slice %219 {offsets = [0, 0], sizes = [2, 32], strides = [1, 1]} : vector<2x128xf32> to vector<2x32xf32>
    %222 = vector.extract_strided_slice %215 {offsets = [0, 32], sizes = [2, 32], strides = [1, 1]} : vector<2x128xf32> to vector<2x32xf32>
    %223 = vector.extract_strided_slice %219 {offsets = [0, 32], sizes = [2, 32], strides = [1, 1]} : vector<2x128xf32> to vector<2x32xf32>
    %224 = vector.extract_strided_slice %215 {offsets = [0, 64], sizes = [2, 32], strides = [1, 1]} : vector<2x128xf32> to vector<2x32xf32>
    %225 = vector.extract_strided_slice %219 {offsets = [0, 64], sizes = [2, 32], strides = [1, 1]} : vector<2x128xf32> to vector<2x32xf32>
    %226 = vector.extract_strided_slice %215 {offsets = [0, 96], sizes = [2, 32], strides = [1, 1]} : vector<2x128xf32> to vector<2x32xf32>
    %227 = vector.extract_strided_slice %219 {offsets = [0, 96], sizes = [2, 32], strides = [1, 1]} : vector<2x128xf32> to vector<2x32xf32>
    %228 = tpu.concatenate %220, %221, %222, %223, %224, %225, %226, %227 in 1 : vector<2x32xf32>, vector<2x32xf32>, vector<2x32xf32>, vector<2x32xf32>, vector<2x32xf32>, vector<2x32xf32>, vector<2x32xf32>, vector<2x32xf32> -> vector<2x256xf32>
    %cst_54 = arith.constant dense<0.000000e+00> : vector<2x256xf32>
    %229 = tpu.matmul %211, %3, %cst_54 {dimension_numbers = #tpu.dot_dimension_numbers<[1], [0], [0], [1], [0, 0, 1, 1], [], []>} : vector<2x64xf32>, vector<64x256xf32>, vector<2x256xf32> -> vector<2x256xf32>
    %230 = arith.addf %228, %229 : vector<2x256xf32>
    %231 = vector.extract_strided_slice %230 {offsets = [0, 0], sizes = [2, 64], strides = [1, 1]} : vector<2x256xf32> to vector<2x64xf32>
    %232 = arith.negf %231 : vector<2x64xf32>
    %233 = math.exp %232 : vector<2x64xf32>
    %cst_55 = arith.constant 1.000000e+00 : f32
    %234 = vector.broadcast %cst_55 : f32 to vector<2x64xf32>
    %235 = arith.addf %234, %233 : vector<2x64xf32>
    %236 = arith.divf %234, %235 : vector<2x64xf32>
    %237 = vector.extract_strided_slice %230 {offsets = [0, 64], sizes = [2, 64], strides = [1, 1]} : vector<2x256xf32> to vector<2x64xf32>
    %238 = arith.negf %237 : vector<2x64xf32>
    %239 = math.exp %238 : vector<2x64xf32>
    %cst_56 = arith.constant 1.000000e+00 : f32
    %240 = vector.broadcast %cst_56 : f32 to vector<2x64xf32>
    %241 = arith.addf %240, %239 : vector<2x64xf32>
    %242 = arith.divf %240, %241 : vector<2x64xf32>
    %243 = vector.extract_strided_slice %230 {offsets = [0, 128], sizes = [2, 64], strides = [1, 1]} : vector<2x256xf32> to vector<2x64xf32>
    %244 = math.tanh %243 : vector<2x64xf32>
    %245 = vector.extract_strided_slice %230 {offsets = [0, 192], sizes = [2, 64], strides = [1, 1]} : vector<2x256xf32> to vector<2x64xf32>
    %246 = arith.negf %245 : vector<2x64xf32>
    %247 = math.exp %246 : vector<2x64xf32>
    %cst_57 = arith.constant 1.000000e+00 : f32
    %248 = vector.broadcast %cst_57 : f32 to vector<2x64xf32>
    %249 = arith.addf %248, %247 : vector<2x64xf32>
    %250 = arith.divf %248, %249 : vector<2x64xf32>
    %251 = arith.mulf %242, %212 : vector<2x64xf32>
    %252 = arith.mulf %236, %244 : vector<2x64xf32>
    %253 = arith.addf %251, %252 : vector<2x64xf32>
    %254 = math.tanh %253 : vector<2x64xf32>
    %255 = arith.mulf %250, %254 : vector<2x64xf32>
    %256 = arith.addi %6, %c4_i32 : i32
    %257 = vector.broadcast %256 : i32 to vector<2x64xi32>
    %258 = arith.muli %4, %257 : vector<2x64xi32>
    %259 = arith.addi %258, %5 : vector<2x64xi32>
    %c0_i32_58 = arith.constant 0 : i32
    %260 = vector.broadcast %c0_i32_58 : i32 to vector<2x64xi32>
    %261 = arith.cmpi slt, %259, %260 : vector<2x64xi32>
    %262 = arith.select %261, %255, %211 : vector<2x64xi1>, vector<2x64xf32>
    %263 = arith.select %261, %253, %212 : vector<2x64xi1>, vector<2x64xf32>
    %c5_i32 = arith.constant 5 : i32
    %264 = arith.index_cast %c5_i32 : i32 to index
    %c0_59 = arith.constant 0 : index
    %c0_60 = arith.constant 0 : index
    %265 = vector.load %arg2[%264, %c0_59, %c0_60] : memref<8x2x128xf32, #tpu.memory_space<vmem>>, vector<1x2x128xf32>
    %266 = vector.shape_cast %265 : vector<1x2x128xf32> to vector<2x128xf32>
    %c7_i32_61 = arith.constant 7 : i32
    %267 = arith.subi %c7_i32_61, %c5_i32 : i32
    %268 = arith.index_cast %267 : i32 to index
    %c0_62 = arith.constant 0 : index
    %c0_63 = arith.constant 0 : index
    %269 = vector.load %arg3[%268, %c0_62, %c0_63] : memref<8x2x128xf32, #tpu.memory_space<vmem>>, vector<1x2x128xf32>
    %270 = vector.shape_cast %269 : vector<1x2x128xf32> to vector<2x128xf32>
    %271 = vector.extract_strided_slice %266 {offsets = [0, 0], sizes = [2, 32], strides = [1, 1]} : vector<2x128xf32> to vector<2x32xf32>
    %272 = vector.extract_strided_slice %270 {offsets = [0, 0], sizes = [2, 32], strides = [1, 1]} : vector<2x128xf32> to vector<2x32xf32>
    %273 = vector.extract_strided_slice %266 {offsets = [0, 32], sizes = [2, 32], strides = [1, 1]} : vector<2x128xf32> to vector<2x32xf32>
    %274 = vector.extract_strided_slice %270 {offsets = [0, 32], sizes = [2, 32], strides = [1, 1]} : vector<2x128xf32> to vector<2x32xf32>
    %275 = vector.extract_strided_slice %266 {offsets = [0, 64], sizes = [2, 32], strides = [1, 1]} : vector<2x128xf32> to vector<2x32xf32>
    %276 = vector.extract_strided_slice %270 {offsets = [0, 64], sizes = [2, 32], strides = [1, 1]} : vector<2x128xf32> to vector<2x32xf32>
    %277 = vector.extract_strided_slice %266 {offsets = [0, 96], sizes = [2, 32], strides = [1, 1]} : vector<2x128xf32> to vector<2x32xf32>
    %278 = vector.extract_strided_slice %270 {offsets = [0, 96], sizes = [2, 32], strides = [1, 1]} : vector<2x128xf32> to vector<2x32xf32>
    %279 = tpu.concatenate %271, %272, %273, %274, %275, %276, %277, %278 in 1 : vector<2x32xf32>, vector<2x32xf32>, vector<2x32xf32>, vector<2x32xf32>, vector<2x32xf32>, vector<2x32xf32>, vector<2x32xf32>, vector<2x32xf32> -> vector<2x256xf32>
    %cst_64 = arith.constant dense<0.000000e+00> : vector<2x256xf32>
    %280 = tpu.matmul %262, %3, %cst_64 {dimension_numbers = #tpu.dot_dimension_numbers<[1], [0], [0], [1], [0, 0, 1, 1], [], []>} : vector<2x64xf32>, vector<64x256xf32>, vector<2x256xf32> -> vector<2x256xf32>
    %281 = arith.addf %279, %280 : vector<2x256xf32>
    %282 = vector.extract_strided_slice %281 {offsets = [0, 0], sizes = [2, 64], strides = [1, 1]} : vector<2x256xf32> to vector<2x64xf32>
    %283 = arith.negf %282 : vector<2x64xf32>
    %284 = math.exp %283 : vector<2x64xf32>
    %cst_65 = arith.constant 1.000000e+00 : f32
    %285 = vector.broadcast %cst_65 : f32 to vector<2x64xf32>
    %286 = arith.addf %285, %284 : vector<2x64xf32>
    %287 = arith.divf %285, %286 : vector<2x64xf32>
    %288 = vector.extract_strided_slice %281 {offsets = [0, 64], sizes = [2, 64], strides = [1, 1]} : vector<2x256xf32> to vector<2x64xf32>
    %289 = arith.negf %288 : vector<2x64xf32>
    %290 = math.exp %289 : vector<2x64xf32>
    %cst_66 = arith.constant 1.000000e+00 : f32
    %291 = vector.broadcast %cst_66 : f32 to vector<2x64xf32>
    %292 = arith.addf %291, %290 : vector<2x64xf32>
    %293 = arith.divf %291, %292 : vector<2x64xf32>
    %294 = vector.extract_strided_slice %281 {offsets = [0, 128], sizes = [2, 64], strides = [1, 1]} : vector<2x256xf32> to vector<2x64xf32>
    %295 = math.tanh %294 : vector<2x64xf32>
    %296 = vector.extract_strided_slice %281 {offsets = [0, 192], sizes = [2, 64], strides = [1, 1]} : vector<2x256xf32> to vector<2x64xf32>
    %297 = arith.negf %296 : vector<2x64xf32>
    %298 = math.exp %297 : vector<2x64xf32>
    %cst_67 = arith.constant 1.000000e+00 : f32
    %299 = vector.broadcast %cst_67 : f32 to vector<2x64xf32>
    %300 = arith.addf %299, %298 : vector<2x64xf32>
    %301 = arith.divf %299, %300 : vector<2x64xf32>
    %302 = arith.mulf %293, %263 : vector<2x64xf32>
    %303 = arith.mulf %287, %295 : vector<2x64xf32>
    %304 = arith.addf %302, %303 : vector<2x64xf32>
    %305 = math.tanh %304 : vector<2x64xf32>
    %306 = arith.mulf %301, %305 : vector<2x64xf32>
    %307 = arith.addi %6, %c5_i32 : i32
    %308 = vector.broadcast %307 : i32 to vector<2x64xi32>
    %309 = arith.muli %4, %308 : vector<2x64xi32>
    %310 = arith.addi %309, %5 : vector<2x64xi32>
    %c0_i32_68 = arith.constant 0 : i32
    %311 = vector.broadcast %c0_i32_68 : i32 to vector<2x64xi32>
    %312 = arith.cmpi slt, %310, %311 : vector<2x64xi32>
    %313 = arith.select %312, %306, %262 : vector<2x64xi1>, vector<2x64xf32>
    %314 = arith.select %312, %304, %263 : vector<2x64xi1>, vector<2x64xf32>
    %c6_i32 = arith.constant 6 : i32
    %315 = arith.index_cast %c6_i32 : i32 to index
    %c0_69 = arith.constant 0 : index
    %c0_70 = arith.constant 0 : index
    %316 = vector.load %arg2[%315, %c0_69, %c0_70] : memref<8x2x128xf32, #tpu.memory_space<vmem>>, vector<1x2x128xf32>
    %317 = vector.shape_cast %316 : vector<1x2x128xf32> to vector<2x128xf32>
    %c7_i32_71 = arith.constant 7 : i32
    %318 = arith.subi %c7_i32_71, %c6_i32 : i32
    %319 = arith.index_cast %318 : i32 to index
    %c0_72 = arith.constant 0 : index
    %c0_73 = arith.constant 0 : index
    %320 = vector.load %arg3[%319, %c0_72, %c0_73] : memref<8x2x128xf32, #tpu.memory_space<vmem>>, vector<1x2x128xf32>
    %321 = vector.shape_cast %320 : vector<1x2x128xf32> to vector<2x128xf32>
    %322 = vector.extract_strided_slice %317 {offsets = [0, 0], sizes = [2, 32], strides = [1, 1]} : vector<2x128xf32> to vector<2x32xf32>
    %323 = vector.extract_strided_slice %321 {offsets = [0, 0], sizes = [2, 32], strides = [1, 1]} : vector<2x128xf32> to vector<2x32xf32>
    %324 = vector.extract_strided_slice %317 {offsets = [0, 32], sizes = [2, 32], strides = [1, 1]} : vector<2x128xf32> to vector<2x32xf32>
    %325 = vector.extract_strided_slice %321 {offsets = [0, 32], sizes = [2, 32], strides = [1, 1]} : vector<2x128xf32> to vector<2x32xf32>
    %326 = vector.extract_strided_slice %317 {offsets = [0, 64], sizes = [2, 32], strides = [1, 1]} : vector<2x128xf32> to vector<2x32xf32>
    %327 = vector.extract_strided_slice %321 {offsets = [0, 64], sizes = [2, 32], strides = [1, 1]} : vector<2x128xf32> to vector<2x32xf32>
    %328 = vector.extract_strided_slice %317 {offsets = [0, 96], sizes = [2, 32], strides = [1, 1]} : vector<2x128xf32> to vector<2x32xf32>
    %329 = vector.extract_strided_slice %321 {offsets = [0, 96], sizes = [2, 32], strides = [1, 1]} : vector<2x128xf32> to vector<2x32xf32>
    %330 = tpu.concatenate %322, %323, %324, %325, %326, %327, %328, %329 in 1 : vector<2x32xf32>, vector<2x32xf32>, vector<2x32xf32>, vector<2x32xf32>, vector<2x32xf32>, vector<2x32xf32>, vector<2x32xf32>, vector<2x32xf32> -> vector<2x256xf32>
    %cst_74 = arith.constant dense<0.000000e+00> : vector<2x256xf32>
    %331 = tpu.matmul %313, %3, %cst_74 {dimension_numbers = #tpu.dot_dimension_numbers<[1], [0], [0], [1], [0, 0, 1, 1], [], []>} : vector<2x64xf32>, vector<64x256xf32>, vector<2x256xf32> -> vector<2x256xf32>
    %332 = arith.addf %330, %331 : vector<2x256xf32>
    %333 = vector.extract_strided_slice %332 {offsets = [0, 0], sizes = [2, 64], strides = [1, 1]} : vector<2x256xf32> to vector<2x64xf32>
    %334 = arith.negf %333 : vector<2x64xf32>
    %335 = math.exp %334 : vector<2x64xf32>
    %cst_75 = arith.constant 1.000000e+00 : f32
    %336 = vector.broadcast %cst_75 : f32 to vector<2x64xf32>
    %337 = arith.addf %336, %335 : vector<2x64xf32>
    %338 = arith.divf %336, %337 : vector<2x64xf32>
    %339 = vector.extract_strided_slice %332 {offsets = [0, 64], sizes = [2, 64], strides = [1, 1]} : vector<2x256xf32> to vector<2x64xf32>
    %340 = arith.negf %339 : vector<2x64xf32>
    %341 = math.exp %340 : vector<2x64xf32>
    %cst_76 = arith.constant 1.000000e+00 : f32
    %342 = vector.broadcast %cst_76 : f32 to vector<2x64xf32>
    %343 = arith.addf %342, %341 : vector<2x64xf32>
    %344 = arith.divf %342, %343 : vector<2x64xf32>
    %345 = vector.extract_strided_slice %332 {offsets = [0, 128], sizes = [2, 64], strides = [1, 1]} : vector<2x256xf32> to vector<2x64xf32>
    %346 = math.tanh %345 : vector<2x64xf32>
    %347 = vector.extract_strided_slice %332 {offsets = [0, 192], sizes = [2, 64], strides = [1, 1]} : vector<2x256xf32> to vector<2x64xf32>
    %348 = arith.negf %347 : vector<2x64xf32>
    %349 = math.exp %348 : vector<2x64xf32>
    %cst_77 = arith.constant 1.000000e+00 : f32
    %350 = vector.broadcast %cst_77 : f32 to vector<2x64xf32>
    %351 = arith.addf %350, %349 : vector<2x64xf32>
    %352 = arith.divf %350, %351 : vector<2x64xf32>
    %353 = arith.mulf %344, %314 : vector<2x64xf32>
    %354 = arith.mulf %338, %346 : vector<2x64xf32>
    %355 = arith.addf %353, %354 : vector<2x64xf32>
    %356 = math.tanh %355 : vector<2x64xf32>
    %357 = arith.mulf %352, %356 : vector<2x64xf32>
    %358 = arith.addi %6, %c6_i32 : i32
    %359 = vector.broadcast %358 : i32 to vector<2x64xi32>
    %360 = arith.muli %4, %359 : vector<2x64xi32>
    %361 = arith.addi %360, %5 : vector<2x64xi32>
    %c0_i32_78 = arith.constant 0 : i32
    %362 = vector.broadcast %c0_i32_78 : i32 to vector<2x64xi32>
    %363 = arith.cmpi slt, %361, %362 : vector<2x64xi32>
    %364 = arith.select %363, %357, %313 : vector<2x64xi1>, vector<2x64xf32>
    %365 = arith.select %363, %355, %314 : vector<2x64xi1>, vector<2x64xf32>
    %c7_i32_79 = arith.constant 7 : i32
    %366 = arith.index_cast %c7_i32_79 : i32 to index
    %c0_80 = arith.constant 0 : index
    %c0_81 = arith.constant 0 : index
    %367 = vector.load %arg2[%366, %c0_80, %c0_81] : memref<8x2x128xf32, #tpu.memory_space<vmem>>, vector<1x2x128xf32>
    %368 = vector.shape_cast %367 : vector<1x2x128xf32> to vector<2x128xf32>
    %c7_i32_82 = arith.constant 7 : i32
    %369 = arith.subi %c7_i32_82, %c7_i32_79 : i32
    %370 = arith.index_cast %369 : i32 to index
    %c0_83 = arith.constant 0 : index
    %c0_84 = arith.constant 0 : index
    %371 = vector.load %arg3[%370, %c0_83, %c0_84] : memref<8x2x128xf32, #tpu.memory_space<vmem>>, vector<1x2x128xf32>
    %372 = vector.shape_cast %371 : vector<1x2x128xf32> to vector<2x128xf32>
    %373 = vector.extract_strided_slice %368 {offsets = [0, 0], sizes = [2, 32], strides = [1, 1]} : vector<2x128xf32> to vector<2x32xf32>
    %374 = vector.extract_strided_slice %372 {offsets = [0, 0], sizes = [2, 32], strides = [1, 1]} : vector<2x128xf32> to vector<2x32xf32>
    %375 = vector.extract_strided_slice %368 {offsets = [0, 32], sizes = [2, 32], strides = [1, 1]} : vector<2x128xf32> to vector<2x32xf32>
    %376 = vector.extract_strided_slice %372 {offsets = [0, 32], sizes = [2, 32], strides = [1, 1]} : vector<2x128xf32> to vector<2x32xf32>
    %377 = vector.extract_strided_slice %368 {offsets = [0, 64], sizes = [2, 32], strides = [1, 1]} : vector<2x128xf32> to vector<2x32xf32>
    %378 = vector.extract_strided_slice %372 {offsets = [0, 64], sizes = [2, 32], strides = [1, 1]} : vector<2x128xf32> to vector<2x32xf32>
    %379 = vector.extract_strided_slice %368 {offsets = [0, 96], sizes = [2, 32], strides = [1, 1]} : vector<2x128xf32> to vector<2x32xf32>
    %380 = vector.extract_strided_slice %372 {offsets = [0, 96], sizes = [2, 32], strides = [1, 1]} : vector<2x128xf32> to vector<2x32xf32>
    %381 = tpu.concatenate %373, %374, %375, %376, %377, %378, %379, %380 in 1 : vector<2x32xf32>, vector<2x32xf32>, vector<2x32xf32>, vector<2x32xf32>, vector<2x32xf32>, vector<2x32xf32>, vector<2x32xf32>, vector<2x32xf32> -> vector<2x256xf32>
    %cst_85 = arith.constant dense<0.000000e+00> : vector<2x256xf32>
    %382 = tpu.matmul %364, %3, %cst_85 {dimension_numbers = #tpu.dot_dimension_numbers<[1], [0], [0], [1], [0, 0, 1, 1], [], []>} : vector<2x64xf32>, vector<64x256xf32>, vector<2x256xf32> -> vector<2x256xf32>
    %383 = arith.addf %381, %382 : vector<2x256xf32>
    %384 = vector.extract_strided_slice %383 {offsets = [0, 0], sizes = [2, 64], strides = [1, 1]} : vector<2x256xf32> to vector<2x64xf32>
    %385 = arith.negf %384 : vector<2x64xf32>
    %386 = math.exp %385 : vector<2x64xf32>
    %cst_86 = arith.constant 1.000000e+00 : f32
    %387 = vector.broadcast %cst_86 : f32 to vector<2x64xf32>
    %388 = arith.addf %387, %386 : vector<2x64xf32>
    %389 = arith.divf %387, %388 : vector<2x64xf32>
    %390 = vector.extract_strided_slice %383 {offsets = [0, 64], sizes = [2, 64], strides = [1, 1]} : vector<2x256xf32> to vector<2x64xf32>
    %391 = arith.negf %390 : vector<2x64xf32>
    %392 = math.exp %391 : vector<2x64xf32>
    %cst_87 = arith.constant 1.000000e+00 : f32
    %393 = vector.broadcast %cst_87 : f32 to vector<2x64xf32>
    %394 = arith.addf %393, %392 : vector<2x64xf32>
    %395 = arith.divf %393, %394 : vector<2x64xf32>
    %396 = vector.extract_strided_slice %383 {offsets = [0, 128], sizes = [2, 64], strides = [1, 1]} : vector<2x256xf32> to vector<2x64xf32>
    %397 = math.tanh %396 : vector<2x64xf32>
    %398 = vector.extract_strided_slice %383 {offsets = [0, 192], sizes = [2, 64], strides = [1, 1]} : vector<2x256xf32> to vector<2x64xf32>
    %399 = arith.negf %398 : vector<2x64xf32>
    %400 = math.exp %399 : vector<2x64xf32>
    %cst_88 = arith.constant 1.000000e+00 : f32
    %401 = vector.broadcast %cst_88 : f32 to vector<2x64xf32>
    %402 = arith.addf %401, %400 : vector<2x64xf32>
    %403 = arith.divf %401, %402 : vector<2x64xf32>
    %404 = arith.mulf %395, %365 : vector<2x64xf32>
    %405 = arith.mulf %389, %397 : vector<2x64xf32>
    %406 = arith.addf %404, %405 : vector<2x64xf32>
    %407 = math.tanh %406 : vector<2x64xf32>
    %408 = arith.mulf %403, %407 : vector<2x64xf32>
    %409 = arith.addi %6, %c7_i32_79 : i32
    %410 = vector.broadcast %409 : i32 to vector<2x64xi32>
    %411 = arith.muli %4, %410 : vector<2x64xi32>
    %412 = arith.addi %411, %5 : vector<2x64xi32>
    %c0_i32_89 = arith.constant 0 : i32
    %413 = vector.broadcast %c0_i32_89 : i32 to vector<2x64xi32>
    %414 = arith.cmpi slt, %412, %413 : vector<2x64xi32>
    %415 = arith.select %414, %408, %364 : vector<2x64xi1>, vector<2x64xf32>
    %416 = arith.select %414, %406, %365 : vector<2x64xi1>, vector<2x64xf32>
    %c8_i32_90 = arith.constant 8 : i32
    %c0_91 = arith.constant 0 : index
    %c0_92 = arith.constant 0 : index
    %417 = vector.load %arg10[%c0_91, %c0_92] : memref<2x64xf32, #tpu.memory_space<vmem>>, vector<2x64xf32>
    tpu.vector_store %arg10[%c0_91, %c0_92], %415 {strides = array<i32>} : memref<2x64xf32, #tpu.memory_space<vmem>>, vector<2x64xf32>,
    %c0_93 = arith.constant 0 : index
    %c0_94 = arith.constant 0 : index
    %418 = vector.load %arg11[%c0_93, %c0_94] : memref<2x64xf32, #tpu.memory_space<vmem>>, vector<2x64xf32>
    tpu.vector_store %arg11[%c0_93, %c0_94], %416 {strides = array<i32>} : memref<2x64xf32, #tpu.memory_space<vmem>>, vector<2x64xf32>,
    %c0_i32_95 = arith.constant 0 : i32
    %419 = arith.cmpi eq, %arg1, %c0_i32_95 : i32
    %420 = arith.extui %419 : i1 to i32
    %c0_i32_96 = arith.constant 0 : i32
    %421 = arith.cmpi ne, %420, %c0_i32_96 : i32
    scf.if %421 {
      %c0_97 = arith.constant 0 : index
      %c0_98 = arith.constant 0 : index
      %422 = vector.load %arg7[%c0_97, %c0_98] : memref<64x2xf32, #tpu.memory_space<vmem>>, vector<64x2xf32>
      %cst_99 = arith.constant dense<0.000000e+00> : vector<2x2xf32>
      %423 = tpu.matmul %415, %422, %cst_99 {dimension_numbers = #tpu.dot_dimension_numbers<[1], [0], [0], [1], [0, 0, 1, 1], [], []>} : vector<2x64xf32>, vector<64x2xf32>, vector<2x2xf32> -> vector<2x2xf32>
      %c0_100 = arith.constant 0 : index
      %c0_101 = arith.constant 0 : index
      %424 = vector.load %arg8[%c0_100, %c0_101] : memref<1x2xf32, #tpu.memory_space<vmem>>, vector<1x2xf32>
      %425 = vector.broadcast %424 : vector<1x2xf32> to vector<2x2xf32>
      %426 = arith.addf %423, %425 : vector<2x2xf32>
      %c0_102 = arith.constant 0 : index
      %c0_103 = arith.constant 0 : index
      %427 = vector.load %arg9[%c0_102, %c0_103] : memref<2x2xf32, #tpu.memory_space<vmem>>, vector<2x2xf32>
      tpu.vector_store %arg9[%c0_102, %c0_103], %426 {strides = array<i32>} : memref<2x2xf32, #tpu.memory_space<vmem>>, vector<2x2xf32>,
    } else {
    }
    return
  }
  func.func @transform_0(%arg0: i32, %arg1: i32) -> (i32, i32, i32) {
    %c0_i32 = arith.constant 0 : i32
    %c0_i32_0 = arith.constant 0 : i32
    return %arg1, %arg0, %c0_i32 : i32, i32, i32
  }
  func.func @transform_1(%arg0: i32, %arg1: i32) -> (i32, i32, i32) {
    %c0_i32 = arith.constant 0 : i32
    %0 = arith.subi %c0_i32, %arg1 : i32
    %c0_i32_0 = arith.constant 0 : i32
    %c0_i32_1 = arith.constant 0 : i32
    return %0, %arg0, %c0_i32_0 : i32, i32, i32
  }
  func.func @transform_2(%arg0: i32, %arg1: i32) -> (i32, i32) {
    %c0_i32 = arith.constant 0 : i32
    %c0_i32_0 = arith.constant 0 : i32
    %c0_i32_1 = arith.constant 0 : i32
    return %c0_i32, %c0_i32_0 : i32, i32
  }
  func.func @transform_3(%arg0: i32, %arg1: i32) -> (i32, i32) {
    %c0_i32 = arith.constant 0 : i32
    %c0_i32_0 = arith.constant 0 : i32
    return %arg0, %c0_i32 : i32, i32
  }
  func.func @transform_4(%arg0: i32, %arg1: i32) -> (i32, i32) {
    %c0_i32 = arith.constant 0 : i32
    %c0_i32_0 = arith.constant 0 : i32
    return %arg0, %c0_i32 : i32, i32
  }
  func.func @transform_5(%arg0: i32, %arg1: i32) -> (i32, i32) {
    %c0_i32 = arith.constant 0 : i32
    %c0_i32_0 = arith.constant 0 : i32
    %c0_i32_1 = arith.constant 0 : i32
    return %c0_i32, %c0_i32_0 : i32, i32
  }
  func.func @transform_6(%arg0: i32, %arg1: i32) -> (i32, i32) {
    %c0_i32 = arith.constant 0 : i32
    %c0_i32_0 = arith.constant 0 : i32
    %c0_i32_1 = arith.constant 0 : i32
    return %c0_i32, %c0_i32_0 : i32, i32
  }
  func.func @transform_7(%arg0: i32, %arg1: i32) -> (i32, i32) {
    %c0_i32 = arith.constant 0 : i32
    %c0_i32_0 = arith.constant 0 : i32
    return %arg0, %c0_i32 : i32, i32
  }
}

</mosaic_0001>

<llo_original>
// kernel: lstm_classifier_forward.1
$region0: #{lstm_classifier_forward.1}
  #allocation0 [shape = 'u32[]', space=smem, size = 0x4, offset = 0x4, fixed_abs, tag = 'smem constant byte address 0x4 - core index']
  #allocation1 [shape = 'u32[72,128]{1,0:T(1,128)}', space=vmem, size = 0x9000, scoped, tag = 'internal scratch']
  #allocation2 [shape = 'f32[2,64]{1,0:T(2,128)}', space=vmem, size = 0x400, scoped, tag = 'scratch operand']
  #allocation3 [shape = 'f32[2,64]{1,0:T(2,128)}', space=vmem, size = 0x400, scoped, tag = 'scratch operand']
  %s0 = inlined_call_operand.vmem [shape: f32[8,2,128], index: 0, kind: input, shape index: {}]
  %s1 = inlined_call_operand.vmem [shape: f32[8,2,128], index: 1, kind: input, shape index: {}]
  %s2 = inlined_call_operand.vmem [shape: f32[64,256], index: 2, kind: input, shape index: {}]
  %s3 = inlined_call_operand.vmem [shape: s32[2,64], index: 3, kind: input, shape index: {}]
  %s4 = inlined_call_operand.vmem [shape: s32[2,64], index: 4, kind: input, shape index: {}]
  %s5 = inlined_call_operand.vmem [shape: f32[64,2], index: 5, kind: input, shape index: {}]
  %s6 = inlined_call_operand.vmem [shape: f32[1,2], index: 6, kind: input, shape index: {}]
  %s7 = inlined_call_operand.hbm [shape: f32[2,2], index: 7, kind: output, shape index: {}]
  %s8 = sld [smem:[#allocation0]]
  $region46: #{lstm_classifier_forward.1} parent=0
    _
  %s10 = ssub.s32 1, %s8
  %s11 = scalar_select 0, %s10, %s8
  $region1: #{lstm_classifier_forward.1} parent=0
    #allocation4 [shape = 'u8[1024]{0}', space=vmem, size = 0x400, scoped, tag = 'output window, operand 0, single buffered']
    #allocation5 [shape = 's32[1]{0}', space=sflag, size = 0x4, scoped, tag = 'scoped memory for lstm_classifier_forward.1']
    %12 = vsyncpa [#allocation5], 0
    // Predicated region
    $region2: #{lstm_classifier_forward.1} parent=1 // pred_check
      _
    $region3: #{lstm_classifier_forward.1} parent=1 // pred_check_branch
      %14 = sbr.rel (0) target = $region5
    $region4: #{lstm_classifier_forward.1} parent=1 // pred_region
      _
    $region5: #{lstm_classifier_forward.1} parent=1 // pred_fallthru
      _
    // Predicated region
    $region6: #{lstm_classifier_forward.1} parent=1 // pred_check
      _
    $region7: #{lstm_classifier_forward.1} parent=1 // pred_check_branch
      %16 = sbr.rel (0) target = $region9
    $region8: #{lstm_classifier_forward.1} parent=1 // pred_region
      %s17 = ssub.s32 0, 0
      %s18 = smul.u32 8, %s17
      %p19 = scmp.lt.s32.totalorder %s18, 7
      %s20 = scalar_select %p19, %s18, 7
      %s21 = smul.addr %s20, 2
      %s22 = scalar_lea.vmem %s1, %s21
      %s23 = ssub.s32 0, 0
      %s24 = smul.u32 8, %s23
    $region9: #{lstm_classifier_forward.1} parent=1 // pred_fallthru
      _
    // Predicated region
    $region10: #{lstm_classifier_forward.1} parent=1 // pred_check
      _
    $region11: #{lstm_classifier_forward.1} parent=1 // pred_check_branch
      %26 = sbr.rel (0) target = $region13
    $region12: #{lstm_classifier_forward.1} parent=1 // pred_region
      _
    $region13: #{lstm_classifier_forward.1} parent=1 // pred_fallthru
      _
    // Predicated region
    $region14: #{lstm_classifier_forward.1} parent=1 // pred_check
      _
    $region15: #{lstm_classifier_forward.1} parent=1 // pred_check_branch
      %28 = sbr.rel (0) target = $region17
    $region16: #{lstm_classifier_forward.1} parent=1 // pred_region
      _
    $region17: #{lstm_classifier_forward.1} parent=1 // pred_fallthru
      _
    // Predicated region
    $region18: #{lstm_classifier_forward.1} parent=1 // pred_check
      _
    $region19: #{lstm_classifier_forward.1} parent=1 // pred_check_branch
      %30 = sbr.rel (0) target = $region21
    $region20: #{lstm_classifier_forward.1} parent=1 // pred_region
      _
    $region21: #{lstm_classifier_forward.1} parent=1 // pred_fallthru
      _
    // Predicated region
    $region22: #{lstm_classifier_forward.1} parent=1 // pred_check
      _
    $region23: #{lstm_classifier_forward.1} parent=1 // pred_check_branch
      %32 = sbr.rel (0) target = $region25
    $region24: #{lstm_classifier_forward.1} parent=1 // pred_region
      _
    $region25: #{lstm_classifier_forward.1} parent=1 // pred_fallthru
      _
    // Predicated region
    $region26: #{lstm_classifier_forward.1} parent=1 // pred_check
      _
    $region27: #{lstm_classifier_forward.1} parent=1 // pred_check_branch
      %34 = sbr.rel (0) target = $region29
    $region28: #{lstm_classifier_forward.1} parent=1 // pred_region
      _
    $region29: #{lstm_classifier_forward.1} parent=1 // pred_fallthru
      _
    %s35 = ssub.s32 0, 0
    %s36 = smul.u32 8, %s35
    %p37 = scmp.lt.s32.totalorder %s36, 7
    %s38 = scalar_select %p37, %s36, 7
    %s39 = smul.addr %s38, 2
    %s40 = scalar_lea.vmem %s1, %s39
    %s41 = ssub.s32 0, 0
    %s42 = smul.u32 8, %s41
    %p43 = scmp.lt.s32.totalorder %s42, 7
    %s44 = scalar_select %p43, %s42, 7
    %s45 = smul.addr %s44, 2
    %s46 = scalar_lea.vmem %s1, %s45
    %s47 = ssub.s32 0, 0
    %s48 = smul.u32 8, %s47
    %p49 = scmp.eq.s32.totalorder 0, 0
    // Predicated region
    $region30: #{lstm_classifier_forward.1} parent=1 // pred_check
      %p50 = pneg %p49
    $region31: #{lstm_classifier_forward.1} parent=1 // pred_check_branch
      %52 = sbr.rel (%p50) target = $region33
    $region32: #{lstm_classifier_forward.1} parent=1 // pred_region
      %vm53 = vcmask 517120
      %54 = vst.msk [vmem:[#allocation2] sm:$0x3] %vm53, 0.0
      %55 = vst.msk [vmem:[#allocation3] sm:$0x3] %vm53, 0.0
    $region33: #{lstm_classifier_forward.1} parent=1 // pred_fallthru
      _
    %v56 = vld [vmem:[%s2] sm:$0xff]
    %v57 = vld [vmem:[%s2 + $0x8] sm:$0xff]
    %v58 = vld [vmem:[%s2 + $0x10] sm:$0xff]
    %v59 = vld [vmem:[%s2 + $0x18] sm:$0xff]
    %v60 = vld [vmem:[%s2 + $0x20] sm:$0xff]
    %v61 = vld [vmem:[%s2 + $0x28] sm:$0xff]
    %v62 = vld [vmem:[%s2 + $0x30] sm:$0xff]
    %v63 = vld [vmem:[%s2 + $0x38] sm:$0xff]
    %v64 = vld [vmem:[%s2 + $0x40] sm:$0xff]
    %v65 = vld [vmem:[%s2 + $0x48] sm:$0xff]
    %v66 = vld [vmem:[%s2 + $0x50] sm:$0xff]
    %v67 = vld [vmem:[%s2 + $0x58] sm:$0xff]
    %v68 = vld [vmem:[%s2 + $0x60] sm:$0xff]
    %v69 = vld [vmem:[%s2 + $0x68] sm:$0xff]
    %v70 = vld [vmem:[%s2 + $0x70] sm:$0xff]
    %v71 = vld [vmem:[%s2 + $0x78] sm:$0xff]
    %v72 = vld [vmem:[%s3] sm:$0x3]
    %v73 = vld [vmem:[%s4] sm:$0x3]
    %s74 = smul.u32 0, 8
    %v75 = vld [vmem:[#allocation2] sm:$0x3]
    %v76 = vld [vmem:[#allocation3] sm:$0x3]
    %v77 = vld [vmem:[%s0] sm:$0x3]
    %s78 = scalar_lea.vmem %s46, 14
    %v79 = vld [vmem:[%s78] sm:$0x3]
    %81 = vrot.lane.b32.xlu0 %v79, 32
    %v82 = vpop.permute.xlu0 %81
    %85 = vrot.lane.b32.xlu0 %v77, 32
    %v86 = vpop.permute.xlu0 %85
    %88 = vrot.lane.b32.xlu0 %v79, 64
    %v89 = vpop.permute.xlu0 %88
    %91 = vrot.lane.b32.xlu0 %v77, 64
    %v92 = vpop.permute.xlu0 %91
    %94 = vrot.lane.b32.xlu0 %v79, 96
    %v95 = vpop.permute.xlu0 %94
    %97 = vrot.lane.b32.xlu0 %v77, 96
    %v98 = vpop.permute.xlu0 %97
    %vm100 = vcmask 261120
    %v101 = vsel %vm100, %v77, %v82
    %vm102 = vcmask 523264
    %v103 = vsel %vm102, %v101, %v86
    %vm104 = vcmask 785408
    %v105 = vsel %vm104, %v103, %v89
    %v106 = vsel %vm100, %v92, %v95
    %v107 = vsel %vm102, %v106, %v98
    %v108 = vsel %vm104, %v107, %v79
    %v110 = vsel %vm102, %v75, 0
    %112 = vmatpush.msra.mxu0 0.0
    %113 = vmatpush.msra.mxu0 0.0
    %114 = vmatpush.msra.mxu0 0.0
    %115 = vmatpush.msra.mxu0 0.0
    %116 = vmatpush.msra.mxu0 0.0
    %117 = vmatpush.msra.mxu0 0.0
    %118 = vmatpush.msra.mxu0 0.0
    %119 = vmatpush.msra.mxu0 0.0
    %120 = vmatpush.msra.mxu0 %v70
    %121 = vmatpush.msra.mxu0 %v68
    %122 = vmatpush.msra.mxu0 %v66
    %123 = vmatpush.msra.mxu0 %v64
    %124 = vmatpush.msra.mxu0 %v62
    %125 = vmatpush.msra.mxu0 %v60
    %126 = vmatpush.msra.mxu0 %v58
    %127 = vmatpush.msra.mxu0 %v56
    %128 = vmatmul.f32.gmra.mxu0 %v110
    %v129 = vpop.f32.mrf.mxu0
    %v130 = vadd.f32 0.0, %v129
    %131 = vdwg.mxu0
    %132 = vmatpush.msra.mxu0 0.0
    %133 = vmatpush.msra.mxu0 0.0
    %134 = vmatpush.msra.mxu0 0.0
    %135 = vmatpush.msra.mxu0 0.0
    %136 = vmatpush.msra.mxu0 0.0
    %137 = vmatpush.msra.mxu0 0.0
    %138 = vmatpush.msra.mxu0 0.0
    %139 = vmatpush.msra.mxu0 0.0
    %140 = vmatpush.msra.mxu0 %v71
    %141 = vmatpush.msra.mxu0 %v69
    %142 = vmatpush.msra.mxu0 %v67
    %143 = vmatpush.msra.mxu0 %v65
    %144 = vmatpush.msra.mxu0 %v63
    %145 = vmatpush.msra.mxu0 %v61
    %146 = vmatpush.msra.mxu0 %v59
    %147 = vmatpush.msra.mxu0 %v57
    %148 = vmatmul.f32.gmra.mxu0 %v110
    %v149 = vpop.f32.mrf.mxu0
    %v150 = vadd.f32 0.0, %v149
    %151 = vdwg.mxu0
    %v152 = vadd.f32 %v105, %v130
    %v153 = vadd.f32 %v108, %v150
    %v154 = vxor.u32 %v152, 2147483648
    %v155 = vmul.f32 %v154, 1.442695
    %v156 = vpow.pop %v155
    %v157 = vadd.f32 %v156, 1.0
    %v158 = vrcp.pop %v157
    %v159 = vmul.f32 %v157, %v158
    %v160 = vsub.f32 1.0, %v159
    %v161 = vmul.f32 %v158, %v160
    %v162 = vadd.f32 %v158, %v161
    %vm163 = vweird.f32 %v157
    %vm164 = vweird.f32 %v158
    %vm165 = vmor %vm163, %vm164
    %v166 = vsel %vm165, %v158, %v162
    %v167 = vand.u32 2147483647, %v157
    %vm168 = vcmp.eq.f32.partialorder %v167, 8.507059e+37
    %v169 = vand.u32 %v157, 2147483648
    %v170 = vor.u32 1.1754944e-38, %v169
    %v171 = vsel %vm168, %v170, %v166
    %v172 = vmul.f32 1.0, %v171
    %v173 = vtanh.pop %v153
    %v174 = vxor.u32 %v153, 2147483648
    %v175 = vmul.f32 %v174, 1.442695
    %v176 = vpow.pop %v175
    %v177 = vadd.f32 %v176, 1.0
    %v178 = vrcp.pop %v177
    %v179 = vmul.f32 %v177, %v178
    %v180 = vsub.f32 1.0, %v179
    %v181 = vmul.f32 %v178, %v180
    %v182 = vadd.f32 %v178, %v181
    %vm183 = vweird.f32 %v177
    %vm184 = vweird.f32 %v178
    %vm185 = vmor %vm183, %vm184
    %v186 = vsel %vm185, %v178, %v182
    %v187 = vand.u32 2147483647, %v177
    %vm188 = vcmp.eq.f32.partialorder %v187, 8.507059e+37
    %v189 = vand.u32 %v177, 2147483648
    %v190 = vor.u32 1.1754944e-38, %v189
    %v191 = vsel %vm188, %v190, %v186
    %v192 = vmul.f32 1.0, %v191
    %194 = vrot.lane.b32.xlu0 %v76, 64
    %v195 = vpop.permute.xlu0 %194
    %v197 = vmul.f32 %v172, %v195
    %v198 = vmul.f32 %v172, %v173
    %200 = vrot.lane.b32.xlu0 %v198, 64
    %v201 = vpop.permute.xlu0 %200
    %v203 = vadd.f32 %v197, %v201
    %v204 = vtanh.pop %v203
    %v205 = vmul.f32 %v192, %v204
    %v206 = vstv %s74
    %v207 = vmul.u32 %v72, %v206
    %v208 = vadd.s32 %v207, %v73
    %vm209 = vcmp.lt.s32.totalorder %v208, 0
    %211 = vrot.lane.b32.xlu0 %v205, 64
    %v212 = vpop.permute.xlu0 %211
    %v214 = vsel %vm209, %v212, %v75
    %216 = vrot.lane.b32.xlu0 %v203, 64
    %v217 = vpop.permute.xlu0 %216
    %v219 = vsel %vm209, %v217, %v76
    %s220 = scalar_lea.vmem %s0, 2
    %v221 = vld [vmem:[%s220] sm:$0x3]
    %s222 = scalar_lea.vmem %s46, 12
    %v223 = vld [vmem:[%s222] sm:$0x3]
    %225 = vrot.lane.b32.xlu0 %v223, 32
    %v226 = vpop.permute.xlu0 %225
    %229 = vrot.lane.b32.xlu0 %v221, 32
    %v230 = vpop.permute.xlu0 %229
    %232 = vrot.lane.b32.xlu0 %v223, 64
    %v233 = vpop.permute.xlu0 %232
    %235 = vrot.lane.b32.xlu0 %v221, 64
    %v236 = vpop.permute.xlu0 %235
    %238 = vrot.lane.b32.xlu0 %v223, 96
    %v239 = vpop.permute.xlu0 %238
    %241 = vrot.lane.b32.xlu0 %v221, 96
    %v242 = vpop.permute.xlu0 %241
    %v244 = vsel %vm100, %v221, %v226
    %v245 = vsel %vm102, %v244, %v230
    %v246 = vsel %vm104, %v245, %v233
    %v247 = vsel %vm100, %v236, %v239
    %v248 = vsel %vm102, %v247, %v242
    %v249 = vsel %vm104, %v248, %v223
    %v251 = vsel %vm102, %v214, 0
    %253 = vmatpush.msra.mxu0 0.0
    %254 = vmatpush.msra.mxu0 0.0
    %255 = vmatpush.msra.mxu0 0.0
    %256 = vmatpush.msra.mxu0 0.0
    %257 = vmatpush.msra.mxu0 0.0
    %258 = vmatpush.msra.mxu0 0.0
    %259 = vmatpush.msra.mxu0 0.0
    %260 = vmatpush.msra.mxu0 0.0
    %261 = vmatpush.msra.mxu0 %v70
    %262 = vmatpush.msra.mxu0 %v68
    %263 = vmatpush.msra.mxu0 %v66
    %264 = vmatpush.msra.mxu0 %v64
    %265 = vmatpush.msra.mxu0 %v62
    %266 = vmatpush.msra.mxu0 %v60
    %267 = vmatpush.msra.mxu0 %v58
    %268 = vmatpush.msra.mxu0 %v56
    %269 = vmatmul.f32.gmra.mxu0 %v251
    %v270 = vpop.f32.mrf.mxu0
    %v271 = vadd.f32 0.0, %v270
    %272 = vdwg.mxu0
    %273 = vmatpush.msra.mxu0 0.0
    %274 = vmatpush.msra.mxu0 0.0
    %275 = vmatpush.msra.mxu0 0.0
    %276 = vmatpush.msra.mxu0 0.0
    %277 = vmatpush.msra.mxu0 0.0
    %278 = vmatpush.msra.mxu0 0.0
    %279 = vmatpush.msra.mxu0 0.0
    %280 = vmatpush.msra.mxu0 0.0
    %281 = vmatpush.msra.mxu0 %v71
    %282 = vmatpush.msra.mxu0 %v69
    %283 = vmatpush.msra.mxu0 %v67
    %284 = vmatpush.msra.mxu0 %v65
    %285 = vmatpush.msra.mxu0 %v63
    %286 = vmatpush.msra.mxu0 %v61
    %287 = vmatpush.msra.mxu0 %v59
    %288 = vmatpush.msra.mxu0 %v57
    %289 = vmatmul.f32.gmra.mxu0 %v251
    %v290 = vpop.f32.mrf.mxu0
    %v291 = vadd.f32 0.0, %v290
    %292 = vdwg.mxu0
    %v293 = vadd.f32 %v246, %v271
    %v294 = vadd.f32 %v249, %v291
    %v295 = vxor.u32 %v293, 2147483648
    %v296 = vmul.f32 %v295, 1.442695
    %v297 = vpow.pop %v296
    %v298 = vadd.f32 %v297, 1.0
    %v299 = vrcp.pop %v298
    %v300 = vmul.f32 %v298, %v299
    %v301 = vsub.f32 1.0, %v300
    %v302 = vmul.f32 %v299, %v301
    %v303 = vadd.f32 %v299, %v302
    %vm304 = vweird.f32 %v298
    %vm305 = vweird.f32 %v299
    %vm306 = vmor %vm304, %vm305
    %v307 = vsel %vm306, %v299, %v303
    %v308 = vand.u32 2147483647, %v298
    %vm309 = vcmp.eq.f32.partialorder %v308, 8.507059e+37
    %v310 = vand.u32 %v298, 2147483648
    %v311 = vor.u32 1.1754944e-38, %v310
    %v312 = vsel %vm309, %v311, %v307
    %v313 = vmul.f32 1.0, %v312
    %v314 = vtanh.pop %v294
    %v315 = vxor.u32 %v294, 2147483648
    %v316 = vmul.f32 %v315, 1.442695
    %v317 = vpow.pop %v316
    %v318 = vadd.f32 %v317, 1.0
    %v319 = vrcp.pop %v318
    %v320 = vmul.f32 %v318, %v319
    %v321 = vsub.f32 1.0, %v320
    %v322 = vmul.f32 %v319, %v321
    %v323 = vadd.f32 %v319, %v322
    %vm324 = vweird.f32 %v318
    %vm325 = vweird.f32 %v319
    %vm326 = vmor %vm324, %vm325
    %v327 = vsel %vm326, %v319, %v323
    %v328 = vand.u32 2147483647, %v318
    %vm329 = vcmp.eq.f32.partialorder %v328, 8.507059e+37
    %v330 = vand.u32 %v318, 2147483648
    %v331 = vor.u32 1.1754944e-38, %v330
    %v332 = vsel %vm329, %v331, %v327
    %v333 = vmul.f32 1.0, %v332
    %335 = vrot.lane.b32.xlu0 %v219, 64
    %v336 = vpop.permute.xlu0 %335
    %v338 = vmul.f32 %v313, %v336
    %v339 = vmul.f32 %v313, %v314
    %341 = vrot.lane.b32.xlu0 %v339, 64
    %v342 = vpop.permute.xlu0 %341
    %v344 = vadd.f32 %v338, %v342
    %v345 = vtanh.pop %v344
    %v346 = vmul.f32 %v333, %v345
    %s347 = sadd.s32 %s74, 1
    %v348 = vstv %s347
    %v349 = vmul.u32 %v72, %v348
    %v350 = vadd.s32 %v349, %v73
    %vm351 = vcmp.lt.s32.totalorder %v350, 0
    %353 = vrot.lane.b32.xlu0 %v346, 64
    %v354 = vpop.permute.xlu0 %353
    %v356 = vsel %vm351, %v354, %v214
    %358 = vrot.lane.b32.xlu0 %v344, 64
    %v359 = vpop.permute.xlu0 %358
    %v361 = vsel %vm351, %v359, %v219
    %s362 = scalar_lea.vmem %s0, 4
    %v363 = vld [vmem:[%s362] sm:$0x3]
    %s364 = scalar_lea.vmem %s46, 10
    %v365 = vld [vmem:[%s364] sm:$0x3]
    %367 = vrot.lane.b32.xlu0 %v365, 32
    %v368 = vpop.permute.xlu0 %367
    %371 = vrot.lane.b32.xlu0 %v363, 32
    %v372 = vpop.permute.xlu0 %371
    %374 = vrot.lane.b32.xlu0 %v365, 64
    %v375 = vpop.permute.xlu0 %374
    %377 = vrot.lane.b32.xlu0 %v363, 64
    %v378 = vpop.permute.xlu0 %377
    %380 = vrot.lane.b32.xlu0 %v365, 96
    %v381 = vpop.permute.xlu0 %380
    %383 = vrot.lane.b32.xlu0 %v363, 96
    %v384 = vpop.permute.xlu0 %383
    %v386 = vsel %vm100, %v363, %v368
    %v387 = vsel %vm102, %v386, %v372
    %v388 = vsel %vm104, %v387, %v375
    %v389 = vsel %vm100, %v378, %v381
    %v390 = vsel %vm102, %v389, %v384
    %v391 = vsel %vm104, %v390, %v365
    %v393 = vsel %vm102, %v356, 0
    %395 = vmatpush.msra.mxu0 0.0
    %396 = vmatpush.msra.mxu0 0.0
    %397 = vmatpush.msra.mxu0 0.0
    %398 = vmatpush.msra.mxu0 0.0
    %399 = vmatpush.msra.mxu0 0.0
    %400 = vmatpush.msra.mxu0 0.0
    %401 = vmatpush.msra.mxu0 0.0
    %402 = vmatpush.msra.mxu0 0.0
    %403 = vmatpush.msra.mxu0 %v70
    %404 = vmatpush.msra.mxu0 %v68
    %405 = vmatpush.msra.mxu0 %v66
    %406 = vmatpush.msra.mxu0 %v64
    %407 = vmatpush.msra.mxu0 %v62
    %408 = vmatpush.msra.mxu0 %v60
    %409 = vmatpush.msra.mxu0 %v58
    %410 = vmatpush.msra.mxu0 %v56
    %411 = vmatmul.f32.gmra.mxu0 %v393
    %v412 = vpop.f32.mrf.mxu0
    %v413 = vadd.f32 0.0, %v412
    %414 = vdwg.mxu0
    %415 = vmatpush.msra.mxu0 0.0
    %416 = vmatpush.msra.mxu0 0.0
    %417 = vmatpush.msra.mxu0 0.0
    %418 = vmatpush.msra.mxu0 0.0
    %419 = vmatpush.msra.mxu0 0.0
    %420 = vmatpush.msra.mxu0 0.0
    %421 = vmatpush.msra.mxu0 0.0
    %422 = vmatpush.msra.mxu0 0.0
    %423 = vmatpush.msra.mxu0 %v71
    %424 = vmatpush.msra.mxu0 %v69
    %425 = vmatpush.msra.mxu0 %v67
    %426 = vmatpush.msra.mxu0 %v65
    %427 = vmatpush.msra.mxu0 %v63
    %428 = vmatpush.msra.mxu0 %v61
    %429 = vmatpush.msra.mxu0 %v59
    %430 = vmatpush.msra.mxu0 %v57
    %431 = vmatmul.f32.gmra.mxu0 %v393
    %v432 = vpop.f32.mrf.mxu0
    %v433 = vadd.f32 0.0, %v432
    %434 = vdwg.mxu0
    %v435 = vadd.f32 %v388, %v413
    %v436 = vadd.f32 %v391, %v433
    %v437 = vxor.u32 %v435, 2147483648
    %v438 = vmul.f32 %v437, 1.442695
    %v439 = vpow.pop %v438
    %v440 = vadd.f32 %v439, 1.0
    %v441 = vrcp.pop %v440
    %v442 = vmul.f32 %v440, %v441
    %v443 = vsub.f32 1.0, %v442
    %v444 = vmul.f32 %v441, %v443
    %v445 = vadd.f32 %v441, %v444
    %vm446 = vweird.f32 %v440
    %vm447 = vweird.f32 %v441
    %vm448 = vmor %vm446, %vm447
    %v449 = vsel %vm448, %v441, %v445
    %v450 = vand.u32 2147483647, %v440
    %vm451 = vcmp.eq.f32.partialorder %v450, 8.507059e+37
    %v452 = vand.u32 %v440, 2147483648
    %v453 = vor.u32 1.1754944e-38, %v452
    %v454 = vsel %vm451, %v453, %v449
    %v455 = vmul.f32 1.0, %v454
    %v456 = vtanh.pop %v436
    %v457 = vxor.u32 %v436, 2147483648
    %v458 = vmul.f32 %v457, 1.442695
    %v459 = vpow.pop %v458
    %v460 = vadd.f32 %v459, 1.0
    %v461 = vrcp.pop %v460
    %v462 = vmul.f32 %v460, %v461
    %v463 = vsub.f32 1.0, %v462
    %v464 = vmul.f32 %v461, %v463
    %v465 = vadd.f32 %v461, %v464
    %vm466 = vweird.f32 %v460
    %vm467 = vweird.f32 %v461
    %vm468 = vmor %vm466, %vm467
    %v469 = vsel %vm468, %v461, %v465
    %v470 = vand.u32 2147483647, %v460
    %vm471 = vcmp.eq.f32.partialorder %v470, 8.507059e+37
    %v472 = vand.u32 %v460, 2147483648
    %v473 = vor.u32 1.1754944e-38, %v472
    %v474 = vsel %vm471, %v473, %v469
    %v475 = vmul.f32 1.0, %v474
    %477 = vrot.lane.b32.xlu0 %v361, 64
    %v478 = vpop.permute.xlu0 %477
    %v480 = vmul.f32 %v455, %v478
    %v481 = vmul.f32 %v455, %v456
    %483 = vrot.lane.b32.xlu0 %v481, 64
    %v484 = vpop.permute.xlu0 %483
    %v486 = vadd.f32 %v480, %v484
    %v487 = vtanh.pop %v486
    %v488 = vmul.f32 %v475, %v487
    %s489 = sadd.s32 %s74, 2
    %v490 = vstv %s489
    %v491 = vmul.u32 %v72, %v490
    %v492 = vadd.s32 %v491, %v73
    %vm493 = vcmp.lt.s32.totalorder %v492, 0
    %495 = vrot.lane.b32.xlu0 %v488, 64
    %v496 = vpop.permute.xlu0 %495
    %v498 = vsel %vm493, %v496, %v356
    %500 = vrot.lane.b32.xlu0 %v486, 64
    %v501 = vpop.permute.xlu0 %500
    %v503 = vsel %vm493, %v501, %v361
    %s504 = scalar_lea.vmem %s0, 6
    %v505 = vld [vmem:[%s504] sm:$0x3]
    %s506 = scalar_lea.vmem %s46, 8
    %v507 = vld [vmem:[%s506] sm:$0x3]
    %509 = vrot.lane.b32.xlu0 %v507, 32
    %v510 = vpop.permute.xlu0 %509
    %513 = vrot.lane.b32.xlu0 %v505, 32
    %v514 = vpop.permute.xlu0 %513
    %516 = vrot.lane.b32.xlu0 %v507, 64
    %v517 = vpop.permute.xlu0 %516
    %519 = vrot.lane.b32.xlu0 %v505, 64
    %v520 = vpop.permute.xlu0 %519
    %522 = vrot.lane.b32.xlu0 %v507, 96
    %v523 = vpop.permute.xlu0 %522
    %525 = vrot.lane.b32.xlu0 %v505, 96
    %v526 = vpop.permute.xlu0 %525
    %v528 = vsel %vm100, %v505, %v510
    %v529 = vsel %vm102, %v528, %v514
    %v530 = vsel %vm104, %v529, %v517
    %v531 = vsel %vm100, %v520, %v523
    %v532 = vsel %vm102, %v531, %v526
    %v533 = vsel %vm104, %v532, %v507
    %v535 = vsel %vm102, %v498, 0
    %537 = vmatpush.msra.mxu0 0.0
    %538 = vmatpush.msra.mxu0 0.0
    %539 = vmatpush.msra.mxu0 0.0
    %540 = vmatpush.msra.mxu0 0.0
    %541 = vmatpush.msra.mxu0 0.0
    %542 = vmatpush.msra.mxu0 0.0
    %543 = vmatpush.msra.mxu0 0.0
    %544 = vmatpush.msra.mxu0 0.0
    %545 = vmatpush.msra.mxu0 %v70
    %546 = vmatpush.msra.mxu0 %v68
    %547 = vmatpush.msra.mxu0 %v66
    %548 = vmatpush.msra.mxu0 %v64
    %549 = vmatpush.msra.mxu0 %v62
    %550 = vmatpush.msra.mxu0 %v60
    %551 = vmatpush.msra.mxu0 %v58
    %552 = vmatpush.msra.mxu0 %v56
    %553 = vmatmul.f32.gmra.mxu0 %v535
    %v554 = vpop.f32.mrf.mxu0
    %v555 = vadd.f32 0.0, %v554
    %556 = vdwg.mxu0
    %557 = vmatpush.msra.mxu0 0.0
    %558 = vmatpush.msra.mxu0 0.0
    %559 = vmatpush.msra.mxu0 0.0
    %560 = vmatpush.msra.mxu0 0.0
    %561 = vmatpush.msra.mxu0 0.0
    %562 = vmatpush.msra.mxu0 0.0
    %563 = vmatpush.msra.mxu0 0.0
    %564 = vmatpush.msra.mxu0 0.0
    %565 = vmatpush.msra.mxu0 %v71
    %566 = vmatpush.msra.mxu0 %v69
    %567 = vmatpush.msra.mxu0 %v67
    %568 = vmatpush.msra.mxu0 %v65
    %569 = vmatpush.msra.mxu0 %v63
    %570 = vmatpush.msra.mxu0 %v61
    %571 = vmatpush.msra.mxu0 %v59
    %572 = vmatpush.msra.mxu0 %v57
    %573 = vmatmul.f32.gmra.mxu0 %v535
    %v574 = vpop.f32.mrf.mxu0
    %v575 = vadd.f32 0.0, %v574
    %576 = vdwg.mxu0
    %v577 = vadd.f32 %v530, %v555
    %v578 = vadd.f32 %v533, %v575
    %v579 = vxor.u32 %v577, 2147483648
    %v580 = vmul.f32 %v579, 1.442695
    %v581 = vpow.pop %v580
    %v582 = vadd.f32 %v581, 1.0
    %v583 = vrcp.pop %v582
    %v584 = vmul.f32 %v582, %v583
    %v585 = vsub.f32 1.0, %v584
    %v586 = vmul.f32 %v583, %v585
    %v587 = vadd.f32 %v583, %v586
    %vm588 = vweird.f32 %v582
    %vm589 = vweird.f32 %v583
    %vm590 = vmor %vm588, %vm589
    %v591 = vsel %vm590, %v583, %v587
    %v592 = vand.u32 2147483647, %v582
    %vm593 = vcmp.eq.f32.partialorder %v592, 8.507059e+37
    %v594 = vand.u32 %v582, 2147483648
    %v595 = vor.u32 1.1754944e-38, %v594
    %v596 = vsel %vm593, %v595, %v591
    %v597 = vmul.f32 1.0, %v596
    %v598 = vtanh.pop %v578
    %v599 = vxor.u32 %v578, 2147483648
    %v600 = vmul.f32 %v599, 1.442695
    %v601 = vpow.pop %v600
    %v602 = vadd.f32 %v601, 1.0
    %v603 = vrcp.pop %v602
    %v604 = vmul.f32 %v602, %v603
    %v605 = vsub.f32 1.0, %v604
    %v606 = vmul.f32 %v603, %v605
    %v607 = vadd.f32 %v603, %v606
    %vm608 = vweird.f32 %v602
    %vm609 = vweird.f32 %v603
    %vm610 = vmor %vm608, %vm609
    %v611 = vsel %vm610, %v603, %v607
    %v612 = vand.u32 2147483647, %v602
    %vm613 = vcmp.eq.f32.partialorder %v612, 8.507059e+37
    %v614 = vand.u32 %v602, 2147483648
    %v615 = vor.u32 1.1754944e-38, %v614
    %v616 = vsel %vm613, %v615, %v611
    %v617 = vmul.f32 1.0, %v616
    %619 = vrot.lane.b32.xlu0 %v503, 64
    %v620 = vpop.permute.xlu0 %619
    %v622 = vmul.f32 %v597, %v620
    %v623 = vmul.f32 %v597, %v598
    %625 = vrot.lane.b32.xlu0 %v623, 64
    %v626 = vpop.permute.xlu0 %625
    %v628 = vadd.f32 %v622, %v626
    %v629 = vtanh.pop %v628
    %v630 = vmul.f32 %v617, %v629
    %s631 = sadd.s32 %s74, 3
    %v632 = vstv %s631
    %v633 = vmul.u32 %v72, %v632
    %v634 = vadd.s32 %v633, %v73
    %vm635 = vcmp.lt.s32.totalorder %v634, 0
    %637 = vrot.lane.b32.xlu0 %v630, 64
    %v638 = vpop.permute.xlu0 %637
    %v640 = vsel %vm635, %v638, %v498
    %642 = vrot.lane.b32.xlu0 %v628, 64
    %v643 = vpop.permute.xlu0 %642
    %v645 = vsel %vm635, %v643, %v503
    %s646 = scalar_lea.vmem %s0, 8
    %v647 = vld [vmem:[%s646] sm:$0x3]
    %s648 = scalar_lea.vmem %s46, 6
    %v649 = vld [vmem:[%s648] sm:$0x3]
    %651 = vrot.lane.b32.xlu0 %v649, 32
    %v652 = vpop.permute.xlu0 %651
    %655 = vrot.lane.b32.xlu0 %v647, 32
    %v656 = vpop.permute.xlu0 %655
    %658 = vrot.lane.b32.xlu0 %v649, 64
    %v659 = vpop.permute.xlu0 %658
    %661 = vrot.lane.b32.xlu0 %v647, 64
    %v662 = vpop.permute.xlu0 %661
    %664 = vrot.lane.b32.xlu0 %v649, 96
    %v665 = vpop.permute.xlu0 %664
    %667 = vrot.lane.b32.xlu0 %v647, 96
    %v668 = vpop.permute.xlu0 %667
    %v670 = vsel %vm100, %v647, %v652
    %v671 = vsel %vm102, %v670, %v656
    %v672 = vsel %vm104, %v671, %v659
    %v673 = vsel %vm100, %v662, %v665
    %v674 = vsel %vm102, %v673, %v668
    %v675 = vsel %vm104, %v674, %v649
    %v677 = vsel %vm102, %v640, 0
    %679 = vmatpush.msra.mxu0 0.0
    %680 = vmatpush.msra.mxu0 0.0
    %681 = vmatpush.msra.mxu0 0.0
    %682 = vmatpush.msra.mxu0 0.0
    %683 = vmatpush.msra.mxu0 0.0
    %684 = vmatpush.msra.mxu0 0.0
    %685 = vmatpush.msra.mxu0 0.0
    %686 = vmatpush.msra.mxu0 0.0
    %687 = vmatpush.msra.mxu0 %v70
    %688 = vmatpush.msra.mxu0 %v68
    %689 = vmatpush.msra.mxu0 %v66
    %690 = vmatpush.msra.mxu0 %v64
    %691 = vmatpush.msra.mxu0 %v62
    %692 = vmatpush.msra.mxu0 %v60
    %693 = vmatpush.msra.mxu0 %v58
    %694 = vmatpush.msra.mxu0 %v56
    %695 = vmatmul.f32.gmra.mxu0 %v677
    %v696 = vpop.f32.mrf.mxu0
    %v697 = vadd.f32 0.0, %v696
    %698 = vdwg.mxu0
    %699 = vmatpush.msra.mxu0 0.0
    %700 = vmatpush.msra.mxu0 0.0
    %701 = vmatpush.msra.mxu0 0.0
    %702 = vmatpush.msra.mxu0 0.0
    %703 = vmatpush.msra.mxu0 0.0
    %704 = vmatpush.msra.mxu0 0.0
    %705 = vmatpush.msra.mxu0 0.0
    %706 = vmatpush.msra.mxu0 0.0
    %707 = vmatpush.msra.mxu0 %v71
    %708 = vmatpush.msra.mxu0 %v69
    %709 = vmatpush.msra.mxu0 %v67
    %710 = vmatpush.msra.mxu0 %v65
    %711 = vmatpush.msra.mxu0 %v63
    %712 = vmatpush.msra.mxu0 %v61
    %713 = vmatpush.msra.mxu0 %v59
    %714 = vmatpush.msra.mxu0 %v57
    %715 = vmatmul.f32.gmra.mxu0 %v677
    %v716 = vpop.f32.mrf.mxu0
    %v717 = vadd.f32 0.0, %v716
    %718 = vdwg.mxu0
    %v719 = vadd.f32 %v672, %v697
    %v720 = vadd.f32 %v675, %v717
    %v721 = vxor.u32 %v719, 2147483648
    %v722 = vmul.f32 %v721, 1.442695
    %v723 = vpow.pop %v722
    %v724 = vadd.f32 %v723, 1.0
    %v725 = vrcp.pop %v724
    %v726 = vmul.f32 %v724, %v725
    %v727 = vsub.f32 1.0, %v726
    %v728 = vmul.f32 %v725, %v727
    %v729 = vadd.f32 %v725, %v728
    %vm730 = vweird.f32 %v724
    %vm731 = vweird.f32 %v725
    %vm732 = vmor %vm730, %vm731
    %v733 = vsel %vm732, %v725, %v729
    %v734 = vand.u32 2147483647, %v724
    %vm735 = vcmp.eq.f32.partialorder %v734, 8.507059e+37
    %v736 = vand.u32 %v724, 2147483648
    %v737 = vor.u32 1.1754944e-38, %v736
    %v738 = vsel %vm735, %v737, %v733
    %v739 = vmul.f32 1.0, %v738
    %v740 = vtanh.pop %v720
    %v741 = vxor.u32 %v720, 2147483648
    %v742 = vmul.f32 %v741, 1.442695
    %v743 = vpow.pop %v742
    %v744 = vadd.f32 %v743, 1.0
    %v745 = vrcp.pop %v744
    %v746 = vmul.f32 %v744, %v745
    %v747 = vsub.f32 1.0, %v746
    %v748 = vmul.f32 %v745, %v747
    %v749 = vadd.f32 %v745, %v748
    %vm750 = vweird.f32 %v744
    %vm751 = vweird.f32 %v745
    %vm752 = vmor %vm750, %vm751
    %v753 = vsel %vm752, %v745, %v749
    %v754 = vand.u32 2147483647, %v744
    %vm755 = vcmp.eq.f32.partialorder %v754, 8.507059e+37
    %v756 = vand.u32 %v744, 2147483648
    %v757 = vor.u32 1.1754944e-38, %v756
    %v758 = vsel %vm755, %v757, %v753
    %v759 = vmul.f32 1.0, %v758
    %761 = vrot.lane.b32.xlu0 %v645, 64
    %v762 = vpop.permute.xlu0 %761
    %v764 = vmul.f32 %v739, %v762
    %v765 = vmul.f32 %v739, %v740
    %767 = vrot.lane.b32.xlu0 %v765, 64
    %v768 = vpop.permute.xlu0 %767
    %v770 = vadd.f32 %v764, %v768
    %v771 = vtanh.pop %v770
    %v772 = vmul.f32 %v759, %v771
    %s773 = sadd.s32 %s74, 4
    %v774 = vstv %s773
    %v775 = vmul.u32 %v72, %v774
    %v776 = vadd.s32 %v775, %v73
    %vm777 = vcmp.lt.s32.totalorder %v776, 0
    %779 = vrot.lane.b32.xlu0 %v772, 64
    %v780 = vpop.permute.xlu0 %779
    %v782 = vsel %vm777, %v780, %v640
    %784 = vrot.lane.b32.xlu0 %v770, 64
    %v785 = vpop.permute.xlu0 %784
    %v787 = vsel %vm777, %v785, %v645
    %s788 = scalar_lea.vmem %s0, 10
    %v789 = vld [vmem:[%s788] sm:$0x3]
    %s790 = scalar_lea.vmem %s46, 4
    %v791 = vld [vmem:[%s790] sm:$0x3]
    %793 = vrot.lane.b32.xlu0 %v791, 32
    %v794 = vpop.permute.xlu0 %793
    %797 = vrot.lane.b32.xlu0 %v789, 32
    %v798 = vpop.permute.xlu0 %797
    %800 = vrot.lane.b32.xlu0 %v791, 64
    %v801 = vpop.permute.xlu0 %800
    %803 = vrot.lane.b32.xlu0 %v789, 64
    %v804 = vpop.permute.xlu0 %803
    %806 = vrot.lane.b32.xlu0 %v791, 96
    %v807 = vpop.permute.xlu0 %806
    %809 = vrot.lane.b32.xlu0 %v789, 96
    %v810 = vpop.permute.xlu0 %809
    %v812 = vsel %vm100, %v789, %v794
    %v813 = vsel %vm102, %v812, %v798
    %v814 = vsel %vm104, %v813, %v801
    %v815 = vsel %vm100, %v804, %v807
    %v816 = vsel %vm102, %v815, %v810
    %v817 = vsel %vm104, %v816, %v791
    %v819 = vsel %vm102, %v782, 0
    %821 = vmatpush.msra.mxu0 0.0
    %822 = vmatpush.msra.mxu0 0.0
    %823 = vmatpush.msra.mxu0 0.0
    %824 = vmatpush.msra.mxu0 0.0
    %825 = vmatpush.msra.mxu0 0.0
    %826 = vmatpush.msra.mxu0 0.0
    %827 = vmatpush.msra.mxu0 0.0
    %828 = vmatpush.msra.mxu0 0.0
    %829 = vmatpush.msra.mxu0 %v70
    %830 = vmatpush.msra.mxu0 %v68
    %831 = vmatpush.msra.mxu0 %v66
    %832 = vmatpush.msra.mxu0 %v64
    %833 = vmatpush.msra.mxu0 %v62
    %834 = vmatpush.msra.mxu0 %v60
    %835 = vmatpush.msra.mxu0 %v58
    %836 = vmatpush.msra.mxu0 %v56
    %837 = vmatmul.f32.gmra.mxu0 %v819
    %v838 = vpop.f32.mrf.mxu0
    %v839 = vadd.f32 0.0, %v838
    %840 = vdwg.mxu0
    %841 = vmatpush.msra.mxu0 0.0
    %842 = vmatpush.msra.mxu0 0.0
    %843 = vmatpush.msra.mxu0 0.0
    %844 = vmatpush.msra.mxu0 0.0
    %845 = vmatpush.msra.mxu0 0.0
    %846 = vmatpush.msra.mxu0 0.0
    %847 = vmatpush.msra.mxu0 0.0
    %848 = vmatpush.msra.mxu0 0.0
    %849 = vmatpush.msra.mxu0 %v71
    %850 = vmatpush.msra.mxu0 %v69
    %851 = vmatpush.msra.mxu0 %v67
    %852 = vmatpush.msra.mxu0 %v65
    %853 = vmatpush.msra.mxu0 %v63
    %854 = vmatpush.msra.mxu0 %v61
    %855 = vmatpush.msra.mxu0 %v59
    %856 = vmatpush.msra.mxu0 %v57
    %857 = vmatmul.f32.gmra.mxu0 %v819
    %v858 = vpop.f32.mrf.mxu0
    %v859 = vadd.f32 0.0, %v858
    %860 = vdwg.mxu0
    %v861 = vadd.f32 %v814, %v839
    %v862 = vadd.f32 %v817, %v859
    %v863 = vxor.u32 %v861, 2147483648
    %v864 = vmul.f32 %v863, 1.442695
    %v865 = vpow.pop %v864
    %v866 = vadd.f32 %v865, 1.0
    %v867 = vrcp.pop %v866
    %v868 = vmul.f32 %v866, %v867
    %v869 = vsub.f32 1.0, %v868
    %v870 = vmul.f32 %v867, %v869
    %v871 = vadd.f32 %v867, %v870
    %vm872 = vweird.f32 %v866
    %vm873 = vweird.f32 %v867
    %vm874 = vmor %vm872, %vm873
    %v875 = vsel %vm874, %v867, %v871
    %v876 = vand.u32 2147483647, %v866
    %vm877 = vcmp.eq.f32.partialorder %v876, 8.507059e+37
    %v878 = vand.u32 %v866, 2147483648
    %v879 = vor.u32 1.1754944e-38, %v878
    %v880 = vsel %vm877, %v879, %v875
    %v881 = vmul.f32 1.0, %v880
    %v882 = vtanh.pop %v862
    %v883 = vxor.u32 %v862, 2147483648
    %v884 = vmul.f32 %v883, 1.442695
    %v885 = vpow.pop %v884
    %v886 = vadd.f32 %v885, 1.0
    %v887 = vrcp.pop %v886
    %v888 = vmul.f32 %v886, %v887
    %v889 = vsub.f32 1.0, %v888
    %v890 = vmul.f32 %v887, %v889
    %v891 = vadd.f32 %v887, %v890
    %vm892 = vweird.f32 %v886
    %vm893 = vweird.f32 %v887
    %vm894 = vmor %vm892, %vm893
    %v895 = vsel %vm894, %v887, %v891
    %v896 = vand.u32 2147483647, %v886
    %vm897 = vcmp.eq.f32.partialorder %v896, 8.507059e+37
    %v898 = vand.u32 %v886, 2147483648
    %v899 = vor.u32 1.1754944e-38, %v898
    %v900 = vsel %vm897, %v899, %v895
    %v901 = vmul.f32 1.0, %v900
    %903 = vrot.lane.b32.xlu0 %v787, 64
    %v904 = vpop.permute.xlu0 %903
    %v906 = vmul.f32 %v881, %v904
    %v907 = vmul.f32 %v881, %v882
    %909 = vrot.lane.b32.xlu0 %v907, 64
    %v910 = vpop.permute.xlu0 %909
    %v912 = vadd.f32 %v906, %v910
    %v913 = vtanh.pop %v912
    %v914 = vmul.f32 %v901, %v913
    %s915 = sadd.s32 %s74, 5
    %v916 = vstv %s915
    %v917 = vmul.u32 %v72, %v916
    %v918 = vadd.s32 %v917, %v73
    %vm919 = vcmp.lt.s32.totalorder %v918, 0
    %921 = vrot.lane.b32.xlu0 %v914, 64
    %v922 = vpop.permute.xlu0 %921
    %v924 = vsel %vm919, %v922, %v782
    %926 = vrot.lane.b32.xlu0 %v912, 64
    %v927 = vpop.permute.xlu0 %926
    %v929 = vsel %vm919, %v927, %v787
    %s930 = scalar_lea.vmem %s0, 12
    %v931 = vld [vmem:[%s930] sm:$0x3]
    %s932 = scalar_lea.vmem %s46, 2
    %v933 = vld [vmem:[%s932] sm:$0x3]
    %935 = vrot.lane.b32.xlu0 %v933, 32
    %v936 = vpop.permute.xlu0 %935
    %939 = vrot.lane.b32.xlu0 %v931, 32
    %v940 = vpop.permute.xlu0 %939
    %942 = vrot.lane.b32.xlu0 %v933, 64
    %v943 = vpop.permute.xlu0 %942
    %945 = vrot.lane.b32.xlu0 %v931, 64
    %v946 = vpop.permute.xlu0 %945
    %948 = vrot.lane.b32.xlu0 %v933, 96
    %v949 = vpop.permute.xlu0 %948
    %951 = vrot.lane.b32.xlu0 %v931, 96
    %v952 = vpop.permute.xlu0 %951
    %v954 = vsel %vm100, %v931, %v936
    %v955 = vsel %vm102, %v954, %v940
    %v956 = vsel %vm104, %v955, %v943
    %v957 = vsel %vm100, %v946, %v949
    %v958 = vsel %vm102, %v957, %v952
    %v959 = vsel %vm104, %v958, %v933
    %v961 = vsel %vm102, %v924, 0
    %963 = vmatpush.msra.mxu0 0.0
    %964 = vmatpush.msra.mxu0 0.0
    %965 = vmatpush.msra.mxu0 0.0
    %966 = vmatpush.msra.mxu0 0.0
    %967 = vmatpush.msra.mxu0 0.0
    %968 = vmatpush.msra.mxu0 0.0
    %969 = vmatpush.msra.mxu0 0.0
    %970 = vmatpush.msra.mxu0 0.0
    %971 = vmatpush.msra.mxu0 %v70
    %972 = vmatpush.msra.mxu0 %v68
    %973 = vmatpush.msra.mxu0 %v66
    %974 = vmatpush.msra.mxu0 %v64
    %975 = vmatpush.msra.mxu0 %v62
    %976 = vmatpush.msra.mxu0 %v60
    %977 = vmatpush.msra.mxu0 %v58
    %978 = vmatpush.msra.mxu0 %v56
    %979 = vmatmul.f32.gmra.mxu0 %v961
    %v980 = vpop.f32.mrf.mxu0
    %v981 = vadd.f32 0.0, %v980
    %982 = vdwg.mxu0
    %983 = vmatpush.msra.mxu0 0.0
    %984 = vmatpush.msra.mxu0 0.0
    %985 = vmatpush.msra.mxu0 0.0
    %986 = vmatpush.msra.mxu0 0.0
    %987 = vmatpush.msra.mxu0 0.0
    %988 = vmatpush.msra.mxu0 0.0
    %989 = vmatpush.msra.mxu0 0.0
    %990 = vmatpush.msra.mxu0 0.0
    %991 = vmatpush.msra.mxu0 %v71
    %992 = vmatpush.msra.mxu0 %v69
    %993 = vmatpush.msra.mxu0 %v67
    %994 = vmatpush.msra.mxu0 %v65
    %995 = vmatpush.msra.mxu0 %v63
    %996 = vmatpush.msra.mxu0 %v61
    %997 = vmatpush.msra.mxu0 %v59
    %998 = vmatpush.msra.mxu0 %v57
    %999 = vmatmul.f32.gmra.mxu0 %v961
    %v1000 = vpop.f32.mrf.mxu0
    %v1001 = vadd.f32 0.0, %v1000
    %1002 = vdwg.mxu0
    %v1003 = vadd.f32 %v956, %v981
    %v1004 = vadd.f32 %v959, %v1001
    %v1005 = vxor.u32 %v1003, 2147483648
    %v1006 = vmul.f32 %v1005, 1.442695
    %v1007 = vpow.pop %v1006
    %v1008 = vadd.f32 %v1007, 1.0
    %v1009 = vrcp.pop %v1008
    %v1010 = vmul.f32 %v1008, %v1009
    %v1011 = vsub.f32 1.0, %v1010
    %v1012 = vmul.f32 %v1009, %v1011
    %v1013 = vadd.f32 %v1009, %v1012
    %vm1014 = vweird.f32 %v1008
    %vm1015 = vweird.f32 %v1009
    %vm1016 = vmor %vm1014, %vm1015
    %v1017 = vsel %vm1016, %v1009, %v1013
    %v1018 = vand.u32 2147483647, %v1008
    %vm1019 = vcmp.eq.f32.partialorder %v1018, 8.507059e+37
    %v1020 = vand.u32 %v1008, 2147483648
    %v1021 = vor.u32 1.1754944e-38, %v1020
    %v1022 = vsel %vm1019, %v1021, %v1017
    %v1023 = vmul.f32 1.0, %v1022
    %v1024 = vtanh.pop %v1004
    %v1025 = vxor.u32 %v1004, 2147483648
    %v1026 = vmul.f32 %v1025, 1.442695
    %v1027 = vpow.pop %v1026
    %v1028 = vadd.f32 %v1027, 1.0
    %v1029 = vrcp.pop %v1028
    %v1030 = vmul.f32 %v1028, %v1029
    %v1031 = vsub.f32 1.0, %v1030
    %v1032 = vmul.f32 %v1029, %v1031
    %v1033 = vadd.f32 %v1029, %v1032
    %vm1034 = vweird.f32 %v1028
    %vm1035 = vweird.f32 %v1029
    %vm1036 = vmor %vm1034, %vm1035
    %v1037 = vsel %vm1036, %v1029, %v1033
    %v1038 = vand.u32 2147483647, %v1028
    %vm1039 = vcmp.eq.f32.partialorder %v1038, 8.507059e+37
    %v1040 = vand.u32 %v1028, 2147483648
    %v1041 = vor.u32 1.1754944e-38, %v1040
    %v1042 = vsel %vm1039, %v1041, %v1037
    %v1043 = vmul.f32 1.0, %v1042
    %1045 = vrot.lane.b32.xlu0 %v929, 64
    %v1046 = vpop.permute.xlu0 %1045
    %v1048 = vmul.f32 %v1023, %v1046
    %v1049 = vmul.f32 %v1023, %v1024
    %1051 = vrot.lane.b32.xlu0 %v1049, 64
    %v1052 = vpop.permute.xlu0 %1051
    %v1054 = vadd.f32 %v1048, %v1052
    %v1055 = vtanh.pop %v1054
    %v1056 = vmul.f32 %v1043, %v1055
    %s1057 = sadd.s32 %s74, 6
    %v1058 = vstv %s1057
    %v1059 = vmul.u32 %v72, %v1058
    %v1060 = vadd.s32 %v1059, %v73
    %vm1061 = vcmp.lt.s32.totalorder %v1060, 0
    %1063 = vrot.lane.b32.xlu0 %v1056, 64
    %v1064 = vpop.permute.xlu0 %1063
    %v1066 = vsel %vm1061, %v1064, %v924
    %1068 = vrot.lane.b32.xlu0 %v1054, 64
    %v1069 = vpop.permute.xlu0 %1068
    %v1071 = vsel %vm1061, %v1069, %v929
    %s1072 = scalar_lea.vmem %s0, 14
    %v1073 = vld [vmem:[%s1072] sm:$0x3]
    %v1074 = vld [vmem:[%s46] sm:$0x3]
    %1076 = vrot.lane.b32.xlu0 %v1074, 32
    %v1077 = vpop.permute.xlu0 %1076
    %1080 = vrot.lane.b32.xlu0 %v1073, 32
    %v1081 = vpop.permute.xlu0 %1080
    %1083 = vrot.lane.b32.xlu0 %v1074, 64
    %v1084 = vpop.permute.xlu0 %1083
    %1086 = vrot.lane.b32.xlu0 %v1073, 64
    %v1087 = vpop.permute.xlu0 %1086
    %1089 = vrot.lane.b32.xlu0 %v1074, 96
    %v1090 = vpop.permute.xlu0 %1089
    %1092 = vrot.lane.b32.xlu0 %v1073, 96
    %v1093 = vpop.permute.xlu0 %1092
    %v1095 = vsel %vm100, %v1073, %v1077
    %v1096 = vsel %vm102, %v1095, %v1081
    %v1097 = vsel %vm104, %v1096, %v1084
    %v1098 = vsel %vm100, %v1087, %v1090
    %v1099 = vsel %vm102, %v1098, %v1093
    %v1100 = vsel %vm104, %v1099, %v1074
    %v1102 = vsel %vm102, %v1066, 0
    %1104 = vmatpush.msra.mxu0 0.0
    %1105 = vmatpush.msra.mxu0 0.0
    %1106 = vmatpush.msra.mxu0 0.0
    %1107 = vmatpush.msra.mxu0 0.0
    %1108 = vmatpush.msra.mxu0 0.0
    %1109 = vmatpush.msra.mxu0 0.0
    %1110 = vmatpush.msra.mxu0 0.0
    %1111 = vmatpush.msra.mxu0 0.0
    %1112 = vmatpush.msra.mxu0 %v70
    %1113 = vmatpush.msra.mxu0 %v68
    %1114 = vmatpush.msra.mxu0 %v66
    %1115 = vmatpush.msra.mxu0 %v64
    %1116 = vmatpush.msra.mxu0 %v62
    %1117 = vmatpush.msra.mxu0 %v60
    %1118 = vmatpush.msra.mxu0 %v58
    %1119 = vmatpush.msra.mxu0 %v56
    %1120 = vmatmul.f32.gmra.mxu0 %v1102
    %v1121 = vpop.f32.mrf.mxu0
    %v1122 = vadd.f32 0.0, %v1121
    %1123 = vdwg.mxu0
    %1124 = vmatpush.msra.mxu0 0.0
    %1125 = vmatpush.msra.mxu0 0.0
    %1126 = vmatpush.msra.mxu0 0.0
    %1127 = vmatpush.msra.mxu0 0.0
    %1128 = vmatpush.msra.mxu0 0.0
    %1129 = vmatpush.msra.mxu0 0.0
    %1130 = vmatpush.msra.mxu0 0.0
    %1131 = vmatpush.msra.mxu0 0.0
    %1132 = vmatpush.msra.mxu0 %v71
    %1133 = vmatpush.msra.mxu0 %v69
    %1134 = vmatpush.msra.mxu0 %v67
    %1135 = vmatpush.msra.mxu0 %v65
    %1136 = vmatpush.msra.mxu0 %v63
    %1137 = vmatpush.msra.mxu0 %v61
    %1138 = vmatpush.msra.mxu0 %v59
    %1139 = vmatpush.msra.mxu0 %v57
    %1140 = vmatmul.f32.gmra.mxu0 %v1102
    %v1141 = vpop.f32.mrf.mxu0
    %v1142 = vadd.f32 0.0, %v1141
    %1143 = vdwg.mxu0
    %v1144 = vadd.f32 %v1097, %v1122
    %v1145 = vadd.f32 %v1100, %v1142
    %v1146 = vxor.u32 %v1144, 2147483648
    %v1147 = vmul.f32 %v1146, 1.442695
    %v1148 = vpow.pop %v1147
    %v1149 = vadd.f32 %v1148, 1.0
    %v1150 = vrcp.pop %v1149
    %v1151 = vmul.f32 %v1149, %v1150
    %v1152 = vsub.f32 1.0, %v1151
    %v1153 = vmul.f32 %v1150, %v1152
    %v1154 = vadd.f32 %v1150, %v1153
    %vm1155 = vweird.f32 %v1149
    %vm1156 = vweird.f32 %v1150
    %vm1157 = vmor %vm1155, %vm1156
    %v1158 = vsel %vm1157, %v1150, %v1154
    %v1159 = vand.u32 2147483647, %v1149
    %vm1160 = vcmp.eq.f32.partialorder %v1159, 8.507059e+37
    %v1161 = vand.u32 %v1149, 2147483648
    %v1162 = vor.u32 1.1754944e-38, %v1161
    %v1163 = vsel %vm1160, %v1162, %v1158
    %v1164 = vmul.f32 1.0, %v1163
    %v1165 = vtanh.pop %v1145
    %v1166 = vxor.u32 %v1145, 2147483648
    %v1167 = vmul.f32 %v1166, 1.442695
    %v1168 = vpow.pop %v1167
    %v1169 = vadd.f32 %v1168, 1.0
    %v1170 = vrcp.pop %v1169
    %v1171 = vmul.f32 %v1169, %v1170
    %v1172 = vsub.f32 1.0, %v1171
    %v1173 = vmul.f32 %v1170, %v1172
    %v1174 = vadd.f32 %v1170, %v1173
    %vm1175 = vweird.f32 %v1169
    %vm1176 = vweird.f32 %v1170
    %vm1177 = vmor %vm1175, %vm1176
    %v1178 = vsel %vm1177, %v1170, %v1174
    %v1179 = vand.u32 2147483647, %v1169
    %vm1180 = vcmp.eq.f32.partialorder %v1179, 8.507059e+37
    %v1181 = vand.u32 %v1169, 2147483648
    %v1182 = vor.u32 1.1754944e-38, %v1181
    %v1183 = vsel %vm1180, %v1182, %v1178
    %v1184 = vmul.f32 1.0, %v1183
    %1186 = vrot.lane.b32.xlu0 %v1071, 64
    %v1187 = vpop.permute.xlu0 %1186
    %v1189 = vmul.f32 %v1164, %v1187
    %v1190 = vmul.f32 %v1164, %v1165
    %1192 = vrot.lane.b32.xlu0 %v1190, 64
    %v1193 = vpop.permute.xlu0 %1192
    %v1195 = vadd.f32 %v1189, %v1193
    %v1196 = vtanh.pop %v1195
    %v1197 = vmul.f32 %v1184, %v1196
    %s1198 = sadd.s32 %s74, 7
    %v1199 = vstv %s1198
    %v1200 = vmul.u32 %v72, %v1199
    %v1201 = vadd.s32 %v1200, %v73
    %vm1202 = vcmp.lt.s32.totalorder %v1201, 0
    %1204 = vrot.lane.b32.xlu0 %v1197, 64
    %v1205 = vpop.permute.xlu0 %1204
    %v1207 = vsel %vm1202, %v1205, %v1066
    %1209 = vrot.lane.b32.xlu0 %v1195, 64
    %v1210 = vpop.permute.xlu0 %1209
    %v1212 = vsel %vm1202, %v1210, %v1071
    %vm1213 = vcmask 517120
    %1214 = vst.msk [vmem:[#allocation2] sm:$0x3] %vm1213, %v1207
    %1215 = vst.msk [vmem:[#allocation3] sm:$0x3] %vm1213, %v1212
    // Predicated region
    $region34: #{lstm_classifier_forward.1} parent=1 // pred_check
      %p1216 = pneg %p49
    $region35: #{lstm_classifier_forward.1} parent=1 // pred_check_branch
      %1218 = sbr.rel (%p1216) target = $region37
    $region36: #{lstm_classifier_forward.1} parent=1 // pred_region
      %v1219 = vld [vmem:[%s5] sm:$0xff]
      %v1220 = vld [vmem:[%s5 + $0x8] sm:$0xff]
      %v1221 = vld [vmem:[%s5 + $0x10] sm:$0xff]
      %v1222 = vld [vmem:[%s5 + $0x18] sm:$0xff]
      %v1223 = vld [vmem:[%s5 + $0x20] sm:$0xff]
      %v1224 = vld [vmem:[%s5 + $0x28] sm:$0xff]
      %v1225 = vld [vmem:[%s5 + $0x30] sm:$0xff]
      %v1226 = vld [vmem:[%s5 + $0x38] sm:$0xff]
      %v1227 = vld [vmem:[%s6] sm:$0x1]
      %v1229 = vperm.slane %v1227, 0
      %v1232 = vsel %vm102, %v1207, 0
      %1234 = vmatpush.msra.mxu0 0.0
      %1235 = vmatpush.msra.mxu0 0.0
      %1236 = vmatpush.msra.mxu0 0.0
      %1237 = vmatpush.msra.mxu0 0.0
      %1238 = vmatpush.msra.mxu0 0.0
      %1239 = vmatpush.msra.mxu0 0.0
      %1240 = vmatpush.msra.mxu0 0.0
      %1241 = vmatpush.msra.mxu0 0.0
      %1242 = vmatpush.msra.mxu0 %v1226
      %1243 = vmatpush.msra.mxu0 %v1225
      %1244 = vmatpush.msra.mxu0 %v1224
      %1245 = vmatpush.msra.mxu0 %v1223
      %1246 = vmatpush.msra.mxu0 %v1222
      %1247 = vmatpush.msra.mxu0 %v1221
      %1248 = vmatpush.msra.mxu0 %v1220
      %1249 = vmatpush.msra.mxu0 %v1219
      %1250 = vmatmul.f32.gmra.mxu0 %v1232
      %v1251 = vpop.f32.mrf.mxu0
      %v1252 = vadd.f32 %v1229, %v1251
      %1253 = vdwg.mxu0
      %vm1254 = vcmask 9216
      %1255 = vst.msk [vmem:[#allocation4] sm:$0x3] %vm1254, %v1252
    $region37: #{lstm_classifier_forward.1} parent=1 // pred_fallthru
      _
    // Predicated region
    $region38: #{lstm_classifier_forward.1} parent=1 // pred_check
      _
    $region39: #{lstm_classifier_forward.1} parent=1 // pred_check_branch
      %1257 = sbr.rel (0) target = $region41
    $region40: #{lstm_classifier_forward.1} parent=1 // pred_region
      %1259 = vsyncadd [#allocation5], 0
      %s1261 = sshll.u32 [#allocation4], 4
      %s1262 = int_to_ptr.vmem [resolvable:$true] %s1261
      %s1263 = sshll.u32 %s7, 4
      %s1264 = int_to_ptr.hbm [resolvable:$true] %s1263
      %1266 = dma.vmem_to_hbm [thread:$0]  %s1262, 32, %s1264, [#allocation5]
    $region41: #{lstm_classifier_forward.1} parent=1 // pred_fallthru
      _
    // Predicated region
    $region42: #{lstm_classifier_forward.1} parent=1 // pred_check
      _
    $region43: #{lstm_classifier_forward.1} parent=1 // pred_check_branch
      %1268 = sbr.rel (0) target = $region45
    $region44: #{lstm_classifier_forward.1} parent=1 // pred_region
      %1270 = dma.done [#allocation5], 32
    $region45: #{lstm_classifier_forward.1} parent=1 // pred_fallthru
      _
    %1271 = vsyncpa [#allocation5], 1

</llo_original>
